<compile_context>
chip_gen: v6e
topology: v6e:2x2x1
jax: 0.10.0
libtpu: 0.0.40
codegen_flags: <defaults>
</compile_context>

<pallas_src>
import functools

import jax
import jax.numpy as jnp
from jax import lax
from jax.experimental import pallas as pl
from jax.experimental.pallas import tpu as pltpu

_MiB = 1024 * 1024
_UNROLL_MAX_TC = 8  # channel tiles up to this size are fully unrolled in the kernel


def _s2d_kernel(x_ref, o_ref, *scratch, bs, n_t, unroll):
    # x_ref : (1, TC, TH, W)             input rows for this (n, channel-tile, row-tile)
    # o_ref : (1, bs, bs, TC, THo, Wo)   output block (channel = b1*bs*C + b2*C + c)
    # scratch[:n_t] : (W, TH)   transposed channel tile(s), W on sublanes (rotated)
    # scratch[n_t:] : (TH, Wo)  per-b2 deinterleaved columns (one buffer per b2)
    #
    # TODO(synk): for 16/8-bit dtypes, pack 2x/4x elements into u32 via pltpu.bitcast
    # before the stride-bs selections so packed sublanes stay dense.
    t_bufs = scratch[:n_t]
    u_bufs = scratch[n_t:]
    TC, TH, W = x_ref.shape[1], x_ref.shape[2], x_ref.shape[3]
    THo, Wo = TH // bs, W // bs

    if unroll:
        for tc in range(TC):
            # Rotate the big scratch so transpose(tc+1) is not serialized behind
            # iteration tc's strided reads (WAR break).
            t_ref = t_bufs[tc % n_t]
            # (TH, W) -> (W, TH): W on sublanes so w = wo*bs + b2 becomes a native
            # sublane-strided load.  TH (the lane axis here) is a multiple of 128
            # whenever the shape allows -> lane-dense XLU pass.
            t_ref[...] = x_ref[0, tc].T
            for b2 in range(bs):
                u_ref = u_bufs[b2]  # per-b2 buffer: no WAR chain across b2
                u_ref[...] = t_ref[pl.ds(b2, Wo, stride=bs), :].T
                for b1 in range(bs):
                    # rows h = ho*bs + b1: sublane-strided, no XLU, straight to block.
                    o_ref[0, b1, b2, tc] = u_ref[pl.ds(b1, THo, stride=bs), :]
    else:
        # Large channel tile: fori_loop bounds live ranges and code size.
        x_view = x_ref.at[0]  # (TC, TH, W)
        o_views = [[o_ref.at[0, b1, b2] for b2 in range(bs)] for b1 in range(bs)]

        def body(tc, carry):
            t_ref = t_bufs[0]
            t_ref[...] = x_view[tc].T
            for b2 in range(bs):
                u_ref = u_bufs[b2]
                u_ref[...] = t_ref[pl.ds(b2, Wo, stride=bs), :].T
                for b1 in range(bs):
                    o_views[b1][b2][tc] = u_ref[pl.ds(b1, THo, stride=bs), :]
            return carry

        lax.fori_loop(0, TC, body, 0)


def _vmem_budget():
    """Generation-aware (target_block_bytes, vmem_limit_bytes)."""
    cap = 128 * _MiB
    try:
        cap = int(getattr(pltpu.get_tpu_info(), "vmem_capacity_bytes", cap))
    except Exception:
        pass  # fall back to the v5e/v6e assumption
    if cap <= 64 * _MiB:
        # v7x-class: 64 MiB physical VMEM per core -> smaller blocks, ~48 MiB limit.
        return 6 * _MiB, 48 * _MiB
    # v5e / v6e: 128 MiB physical VMEM.
    return 8 * _MiB, 64 * _MiB


def _choose_tiles(N, C, Ho, W, bs, itemsize, target, budget):
    """Pick (TC, THo) channel / output-row tile sizes (all host-side, static)."""
    sub = max(8, 32 // itemsize)          # sublane quantum: 8 f32, 16 bf16, 32 int8/fp8
    lane_q = 128 // bs                    # THo multiple making TH = THo*bs lane-dense
    pref = [t for t in range(lane_q, Ho + 1, lane_q) if Ho % t == 0]
    okay = [t for t in range(sub, Ho + 1, sub) if Ho % t == 0]
    cands = pref or okay or [Ho]          # last resort: full Ho (always a legal block)
    tc_divs = [d for d in range(1, C + 1) if C % d == 0]

    def need(tc, tho):
        th = tho * bs
        blk = tc * th * W * itemsize      # input block bytes == output block bytes
        n_t = 2 if (tc <= _UNROLL_MAX_TC and tc > 1) else 1
        scratch = (n_t * th * W + bs * th * (W // bs)) * itemsize
        return blk, 4 * blk + scratch     # double-buffered in+out + scratch

    best = None                           # ((blk, -tc), tc, tho)
    for tc in tc_divs:
        for tho in cands:
            blk, tot = need(tc, tho)
            if blk <= target and tot <= budget:
                key = (blk, -tc)          # biggest block; prefer growing THo over TC
                if best is None or key > best[0]:
                    best = (key, tc, tho)
    if best is None:
        tc, tho = 1, min(cands)           # smallest legal tile; VMEM limit raised below
    else:
        _, tc, tho = best

    # v7x has 2 TensorCores: keep >= 2 (parallel) grid steps when a legal split exists.
    if N * (C // tc) * (Ho // tho) == 1:
        tho_half = [t for t in cands if Ho // t >= 2]
        tc_half = [d for d in tc_divs if C // d >= 2]
        if tho_half:
            tho = max(tho_half)
        elif tc_half:
            tc = max(tc_half)

    return tc, tho, need(tc, tho)[1]


@functools.partial(jax.jit, static_argnames=("block_size",))
def space_to_depth(x, *, block_size=4):
    bs = block_size
    N, C, H, W = x.shape
    assert H % bs == 0 and W % bs == 0, "H and W must be divisible by block_size"
    Ho, Wo = H // bs, W // bs
    itemsize = jnp.dtype(x.dtype).itemsize

    target, limit = _vmem_budget()
    TC, THo, vmem_need = _choose_tiles(N, C, Ho, W, bs, itemsize, target, limit)
    TH = THo * bs
    unroll = TC <= _UNROLL_MAX_TC
    n_t = 2 if (unroll and TC > 1) else 1
    vmem_limit = int(max(limit, vmem_need + 4 * _MiB))

    grid = (N, C // TC, Ho // THo)
    scratch_shapes = (
        [pltpu.VMEM((W, TH), x.dtype) for _ in range(n_t)]
        + [pltpu.VMEM((TH, Wo), x.dtype) for _ in range(bs)]
    )

    y6 = pl.pallas_call(
        functools.partial(_s2d_kernel, bs=bs, n_t=n_t, unroll=unroll),
        out_shape=jax.ShapeDtypeStruct((N, bs, bs, C, Ho, Wo), x.dtype),
        grid=grid,
        # If a trace still shows exposed input DMA, add pipeline_mode=pl.Buffered(3)
        # here (costs one extra input block of VMEM).
        in_specs=[pl.BlockSpec((1, TC, TH, W), lambda n, cb, hb: (n, cb, hb, 0))],
        out_specs=pl.BlockSpec(
            (1, bs, bs, TC, THo, Wo), lambda n, cb, hb: (n, 0, 0, cb, hb, 0)
        ),
        scratch_shapes=scratch_shapes,
        compiler_params=pltpu.CompilerParams(
            dimension_semantics=("parallel", "parallel", "parallel"),
            vmem_limit_bytes=vmem_limit,
        ),
        cost_estimate=pl.CostEstimate(
            flops=0,
            transcendentals=0,
            bytes_accessed=int(2 * N * C * H * W * itemsize),
        ),
    )(x)

    # (N, b1, b2, C, Ho, Wo) -> (N, C*bs*bs, Ho, Wo): contiguous axis merge, free.
    return y6.reshape(N, C * bs * bs, Ho, Wo)


def _reference(x, bs):
    # Pure-JAX mirror of the PyTorch forward (for verification).
    N, C, H, W = x.shape
    x = x.reshape(N, C, H // bs, bs, W // bs, bs)
    x = jnp.transpose(x, (0, 3, 5, 1, 2, 4))
    return x.reshape(N, C * bs * bs, H // bs, W // bs)


if __name__ == "__main__":
    key = jax.random.PRNGKey(0)
    N, C, H, W = 2, 4, 16, 16
    bs = 4  # the module asserts block_size == 4

    x = jax.random.normal(key, (N, C, H, W), dtype=jnp.float32)

    y = space_to_depth(x, block_size=bs)
    y = jax.block_until_ready(y)

    y_ref = _reference(x, bs)
    assert y.shape == (N, C * bs * bs, H // bs, W // bs)
    assert y.dtype == x.dtype
    assert bool(jnp.array_equal(y, y_ref))
    print("KERNEL_OK")
</pallas_src>

<mosaic_0001>
module attributes {stable_mosaic.version = 11 : i64} {
  func.func @_s2d_kernel(%arg0: i32, %arg1: i32, %arg2: i32, %arg3: memref<1x4x16x16xf32, #tpu.memory_space<vmem>>, %arg4: memref<1x4x4x4x4x4xf32, #tpu.memory_space<vmem>>, %arg5: memref<16x16xf32, #tpu.memory_space<vmem>>, %arg6: memref<16x16xf32, #tpu.memory_space<vmem>>, %arg7: memref<16x4xf32, #tpu.memory_space<vmem>>, %arg8: memref<16x4xf32, #tpu.memory_space<vmem>>, %arg9: memref<16x4xf32, #tpu.memory_space<vmem>>, %arg10: memref<16x4xf32, #tpu.memory_space<vmem>>) attributes {dimension_semantics = [#tpu.dimension_semantics<parallel>, #tpu.dimension_semantics<parallel>, #tpu.dimension_semantics<parallel>], iteration_bounds = array<i64: 2, 1, 1>, scalar_prefetch = 0 : i64, scratch_operands = 6 : i64, tpu.core_type = #tpu.core_type<tc>, window_params = [{transform_indices = @transform_0, window_bounds = array<i64: 1, 4, 16, 16>}, {transform_indices = @transform_1, window_bounds = array<i64: 1, 4, 4, 4, 4, 4>}]} {
    %c0 = arith.constant 0 : index
    %c0_0 = arith.constant 0 : index
    %c0_1 = arith.constant 0 : index
    %c0_2 = arith.constant 0 : index
    %0 = vector.load %arg3[%c0, %c0_0, %c0_1, %c0_2] : memref<1x4x16x16xf32, #tpu.memory_space<vmem>>, vector<1x1x16x16xf32>
    %1 = vector.shape_cast %0 : vector<1x1x16x16xf32> to vector<16x16xf32>
    %2 = tpu.transpose %1, [1, 0] : vector<16x16xf32> -> vector<16x16xf32>
    %c0_3 = arith.constant 0 : index
    %c0_4 = arith.constant 0 : index
    %3 = vector.load %arg5[%c0_3, %c0_4] : memref<16x16xf32, #tpu.memory_space<vmem>>, vector<16x16xf32>
    tpu.vector_store %arg5[%c0_3, %c0_4], %2 {strides = array<i32>} : memref<16x16xf32, #tpu.memory_space<vmem>>, vector<16x16xf32>,
    %c0_5 = arith.constant 0 : index
    %c0_6 = arith.constant 0 : index
    %4 = tpu.strided_load %arg5[%c0_5, %c0_6] {strides = array<i32: 4, 1>} : memref<16x16xf32, #tpu.memory_space<vmem>>, vector<4x16xf32>
    %5 = tpu.transpose %4, [1, 0] : vector<4x16xf32> -> vector<16x4xf32>
    %c0_7 = arith.constant 0 : index
    %c0_8 = arith.constant 0 : index
    %6 = vector.load %arg7[%c0_7, %c0_8] : memref<16x4xf32, #tpu.memory_space<vmem>>, vector<16x4xf32>
    tpu.vector_store %arg7[%c0_7, %c0_8], %5 {strides = array<i32>} : memref<16x4xf32, #tpu.memory_space<vmem>>, vector<16x4xf32>,
    %c0_9 = arith.constant 0 : index
    %c0_10 = arith.constant 0 : index
    %7 = tpu.strided_load %arg7[%c0_9, %c0_10] {strides = array<i32: 4, 1>} : memref<16x4xf32, #tpu.memory_space<vmem>>, vector<4x4xf32>
    %c0_11 = arith.constant 0 : index
    %c0_12 = arith.constant 0 : index
    %c0_13 = arith.constant 0 : index
    %c0_14 = arith.constant 0 : index
    %c0_15 = arith.constant 0 : index
    %c0_16 = arith.constant 0 : index
    %8 = vector.load %arg4[%c0_11, %c0_12, %c0_13, %c0_14, %c0_15, %c0_16] : memref<1x4x4x4x4x4xf32, #tpu.memory_space<vmem>>, vector<1x1x1x1x4x4xf32>
    %9 = vector.shape_cast %8 : vector<1x1x1x1x4x4xf32> to vector<4x4xf32>
    %10 = vector.shape_cast %7 : vector<4x4xf32> to vector<1x1x1x1x4x4xf32>
    tpu.vector_store %arg4[%c0_11, %c0_12, %c0_13, %c0_14, %c0_15, %c0_16], %10 {strides = array<i32>} : memref<1x4x4x4x4x4xf32, #tpu.memory_space<vmem>>, vector<1x1x1x1x4x4xf32>,
    %c1 = arith.constant 1 : index
    %c0_17 = arith.constant 0 : index
    %11 = tpu.strided_load %arg7[%c1, %c0_17] {strides = array<i32: 4, 1>} : memref<16x4xf32, #tpu.memory_space<vmem>>, vector<4x4xf32>
    %c0_18 = arith.constant 0 : index
    %c1_19 = arith.constant 1 : index
    %c0_20 = arith.constant 0 : index
    %c0_21 = arith.constant 0 : index
    %c0_22 = arith.constant 0 : index
    %c0_23 = arith.constant 0 : index
    %12 = vector.load %arg4[%c0_18, %c1_19, %c0_20, %c0_21, %c0_22, %c0_23] : memref<1x4x4x4x4x4xf32, #tpu.memory_space<vmem>>, vector<1x1x1x1x4x4xf32>
    %13 = vector.shape_cast %12 : vector<1x1x1x1x4x4xf32> to vector<4x4xf32>
    %14 = vector.shape_cast %11 : vector<4x4xf32> to vector<1x1x1x1x4x4xf32>
    tpu.vector_store %arg4[%c0_18, %c1_19, %c0_20, %c0_21, %c0_22, %c0_23], %14 {strides = array<i32>} : memref<1x4x4x4x4x4xf32, #tpu.memory_space<vmem>>, vector<1x1x1x1x4x4xf32>,
    %c2 = arith.constant 2 : index
    %c0_24 = arith.constant 0 : index
    %15 = tpu.strided_load %arg7[%c2, %c0_24] {strides = array<i32: 4, 1>} : memref<16x4xf32, #tpu.memory_space<vmem>>, vector<4x4xf32>
    %c0_25 = arith.constant 0 : index
    %c2_26 = arith.constant 2 : index
    %c0_27 = arith.constant 0 : index
    %c0_28 = arith.constant 0 : index
    %c0_29 = arith.constant 0 : index
    %c0_30 = arith.constant 0 : index
    %16 = vector.load %arg4[%c0_25, %c2_26, %c0_27, %c0_28, %c0_29, %c0_30] : memref<1x4x4x4x4x4xf32, #tpu.memory_space<vmem>>, vector<1x1x1x1x4x4xf32>
    %17 = vector.shape_cast %16 : vector<1x1x1x1x4x4xf32> to vector<4x4xf32>
    %18 = vector.shape_cast %15 : vector<4x4xf32> to vector<1x1x1x1x4x4xf32>
    tpu.vector_store %arg4[%c0_25, %c2_26, %c0_27, %c0_28, %c0_29, %c0_30], %18 {strides = array<i32>} : memref<1x4x4x4x4x4xf32, #tpu.memory_space<vmem>>, vector<1x1x1x1x4x4xf32>,
    %c3 = arith.constant 3 : index
    %c0_31 = arith.constant 0 : index
    %19 = tpu.strided_load %arg7[%c3, %c0_31] {strides = array<i32: 4, 1>} : memref<16x4xf32, #tpu.memory_space<vmem>>, vector<4x4xf32>
    %c0_32 = arith.constant 0 : index
    %c3_33 = arith.constant 3 : index
    %c0_34 = arith.constant 0 : index
    %c0_35 = arith.constant 0 : index
    %c0_36 = arith.constant 0 : index
    %c0_37 = arith.constant 0 : index
    %20 = vector.load %arg4[%c0_32, %c3_33, %c0_34, %c0_35, %c0_36, %c0_37] : memref<1x4x4x4x4x4xf32, #tpu.memory_space<vmem>>, vector<1x1x1x1x4x4xf32>
    %21 = vector.shape_cast %20 : vector<1x1x1x1x4x4xf32> to vector<4x4xf32>
    %22 = vector.shape_cast %19 : vector<4x4xf32> to vector<1x1x1x1x4x4xf32>
    tpu.vector_store %arg4[%c0_32, %c3_33, %c0_34, %c0_35, %c0_36, %c0_37], %22 {strides = array<i32>} : memref<1x4x4x4x4x4xf32, #tpu.memory_space<vmem>>, vector<1x1x1x1x4x4xf32>,
    %c1_38 = arith.constant 1 : index
    %c0_39 = arith.constant 0 : index
    %23 = tpu.strided_load %arg5[%c1_38, %c0_39] {strides = array<i32: 4, 1>} : memref<16x16xf32, #tpu.memory_space<vmem>>, vector<4x16xf32>
    %24 = tpu.transpose %23, [1, 0] : vector<4x16xf32> -> vector<16x4xf32>
    %c0_40 = arith.constant 0 : index
    %c0_41 = arith.constant 0 : index
    %25 = vector.load %arg8[%c0_40, %c0_41] : memref<16x4xf32, #tpu.memory_space<vmem>>, vector<16x4xf32>
    tpu.vector_store %arg8[%c0_40, %c0_41], %24 {strides = array<i32>} : memref<16x4xf32, #tpu.memory_space<vmem>>, vector<16x4xf32>,
    %c0_42 = arith.constant 0 : index
    %c0_43 = arith.constant 0 : index
    %26 = tpu.strided_load %arg8[%c0_42, %c0_43] {strides = array<i32: 4, 1>} : memref<16x4xf32, #tpu.memory_space<vmem>>, vector<4x4xf32>
    %c0_44 = arith.constant 0 : index
    %c0_45 = arith.constant 0 : index
    %c1_46 = arith.constant 1 : index
    %c0_47 = arith.constant 0 : index
    %c0_48 = arith.constant 0 : index
    %c0_49 = arith.constant 0 : index
    %27 = vector.load %arg4[%c0_44, %c0_45, %c1_46, %c0_47, %c0_48, %c0_49] : memref<1x4x4x4x4x4xf32, #tpu.memory_space<vmem>>, vector<1x1x1x1x4x4xf32>
    %28 = vector.shape_cast %27 : vector<1x1x1x1x4x4xf32> to vector<4x4xf32>
    %29 = vector.shape_cast %26 : vector<4x4xf32> to vector<1x1x1x1x4x4xf32>
    tpu.vector_store %arg4[%c0_44, %c0_45, %c1_46, %c0_47, %c0_48, %c0_49], %29 {strides = array<i32>} : memref<1x4x4x4x4x4xf32, #tpu.memory_space<vmem>>, vector<1x1x1x1x4x4xf32>,
    %c1_50 = arith.constant 1 : index
    %c0_51 = arith.constant 0 : index
    %30 = tpu.strided_load %arg8[%c1_50, %c0_51] {strides = array<i32: 4, 1>} : memref<16x4xf32, #tpu.memory_space<vmem>>, vector<4x4xf32>
    %c0_52 = arith.constant 0 : index
    %c1_53 = arith.constant 1 : index
    %c1_54 = arith.constant 1 : index
    %c0_55 = arith.constant 0 : index
    %c0_56 = arith.constant 0 : index
    %c0_57 = arith.constant 0 : index
    %31 = vector.load %arg4[%c0_52, %c1_53, %c1_54, %c0_55, %c0_56, %c0_57] : memref<1x4x4x4x4x4xf32, #tpu.memory_space<vmem>>, vector<1x1x1x1x4x4xf32>
    %32 = vector.shape_cast %31 : vector<1x1x1x1x4x4xf32> to vector<4x4xf32>
    %33 = vector.shape_cast %30 : vector<4x4xf32> to vector<1x1x1x1x4x4xf32>
    tpu.vector_store %arg4[%c0_52, %c1_53, %c1_54, %c0_55, %c0_56, %c0_57], %33 {strides = array<i32>} : memref<1x4x4x4x4x4xf32, #tpu.memory_space<vmem>>, vector<1x1x1x1x4x4xf32>,
    %c2_58 = arith.constant 2 : index
    %c0_59 = arith.constant 0 : index
    %34 = tpu.strided_load %arg8[%c2_58, %c0_59] {strides = array<i32: 4, 1>} : memref<16x4xf32, #tpu.memory_space<vmem>>, vector<4x4xf32>
    %c0_60 = arith.constant 0 : index
    %c2_61 = arith.constant 2 : index
    %c1_62 = arith.constant 1 : index
    %c0_63 = arith.constant 0 : index
    %c0_64 = arith.constant 0 : index
    %c0_65 = arith.constant 0 : index
    %35 = vector.load %arg4[%c0_60, %c2_61, %c1_62, %c0_63, %c0_64, %c0_65] : memref<1x4x4x4x4x4xf32, #tpu.memory_space<vmem>>, vector<1x1x1x1x4x4xf32>
    %36 = vector.shape_cast %35 : vector<1x1x1x1x4x4xf32> to vector<4x4xf32>
    %37 = vector.shape_cast %34 : vector<4x4xf32> to vector<1x1x1x1x4x4xf32>
    tpu.vector_store %arg4[%c0_60, %c2_61, %c1_62, %c0_63, %c0_64, %c0_65], %37 {strides = array<i32>} : memref<1x4x4x4x4x4xf32, #tpu.memory_space<vmem>>, vector<1x1x1x1x4x4xf32>,
    %c3_66 = arith.constant 3 : index
    %c0_67 = arith.constant 0 : index
    %38 = tpu.strided_load %arg8[%c3_66, %c0_67] {strides = array<i32: 4, 1>} : memref<16x4xf32, #tpu.memory_space<vmem>>, vector<4x4xf32>
    %c0_68 = arith.constant 0 : index
    %c3_69 = arith.constant 3 : index
    %c1_70 = arith.constant 1 : index
    %c0_71 = arith.constant 0 : index
    %c0_72 = arith.constant 0 : index
    %c0_73 = arith.constant 0 : index
    %39 = vector.load %arg4[%c0_68, %c3_69, %c1_70, %c0_71, %c0_72, %c0_73] : memref<1x4x4x4x4x4xf32, #tpu.memory_space<vmem>>, vector<1x1x1x1x4x4xf32>
    %40 = vector.shape_cast %39 : vector<1x1x1x1x4x4xf32> to vector<4x4xf32>
    %41 = vector.shape_cast %38 : vector<4x4xf32> to vector<1x1x1x1x4x4xf32>
    tpu.vector_store %arg4[%c0_68, %c3_69, %c1_70, %c0_71, %c0_72, %c0_73], %41 {strides = array<i32>} : memref<1x4x4x4x4x4xf32, #tpu.memory_space<vmem>>, vector<1x1x1x1x4x4xf32>,
    %c2_74 = arith.constant 2 : index
    %c0_75 = arith.constant 0 : index
    %42 = tpu.strided_load %arg5[%c2_74, %c0_75] {strides = array<i32: 4, 1>} : memref<16x16xf32, #tpu.memory_space<vmem>>, vector<4x16xf32>
    %43 = tpu.transpose %42, [1, 0] : vector<4x16xf32> -> vector<16x4xf32>
    %c0_76 = arith.constant 0 : index
    %c0_77 = arith.constant 0 : index
    %44 = vector.load %arg9[%c0_76, %c0_77] : memref<16x4xf32, #tpu.memory_space<vmem>>, vector<16x4xf32>
    tpu.vector_store %arg9[%c0_76, %c0_77], %43 {strides = array<i32>} : memref<16x4xf32, #tpu.memory_space<vmem>>, vector<16x4xf32>,
    %c0_78 = arith.constant 0 : index
    %c0_79 = arith.constant 0 : index
    %45 = tpu.strided_load %arg9[%c0_78, %c0_79] {strides = array<i32: 4, 1>} : memref<16x4xf32, #tpu.memory_space<vmem>>, vector<4x4xf32>
    %c0_80 = arith.constant 0 : index
    %c0_81 = arith.constant 0 : index
    %c2_82 = arith.constant 2 : index
    %c0_83 = arith.constant 0 : index
    %c0_84 = arith.constant 0 : index
    %c0_85 = arith.constant 0 : index
    %46 = vector.load %arg4[%c0_80, %c0_81, %c2_82, %c0_83, %c0_84, %c0_85] : memref<1x4x4x4x4x4xf32, #tpu.memory_space<vmem>>, vector<1x1x1x1x4x4xf32>
    %47 = vector.shape_cast %46 : vector<1x1x1x1x4x4xf32> to vector<4x4xf32>
    %48 = vector.shape_cast %45 : vector<4x4xf32> to vector<1x1x1x1x4x4xf32>
    tpu.vector_store %arg4[%c0_80, %c0_81, %c2_82, %c0_83, %c0_84, %c0_85], %48 {strides = array<i32>} : memref<1x4x4x4x4x4xf32, #tpu.memory_space<vmem>>, vector<1x1x1x1x4x4xf32>,
    %c1_86 = arith.constant 1 : index
    %c0_87 = arith.constant 0 : index
    %49 = tpu.strided_load %arg9[%c1_86, %c0_87] {strides = array<i32: 4, 1>} : memref<16x4xf32, #tpu.memory_space<vmem>>, vector<4x4xf32>
    %c0_88 = arith.constant 0 : index
    %c1_89 = arith.constant 1 : index
    %c2_90 = arith.constant 2 : index
    %c0_91 = arith.constant 0 : index
    %c0_92 = arith.constant 0 : index
    %c0_93 = arith.constant 0 : index
    %50 = vector.load %arg4[%c0_88, %c1_89, %c2_90, %c0_91, %c0_92, %c0_93] : memref<1x4x4x4x4x4xf32, #tpu.memory_space<vmem>>, vector<1x1x1x1x4x4xf32>
    %51 = vector.shape_cast %50 : vector<1x1x1x1x4x4xf32> to vector<4x4xf32>
    %52 = vector.shape_cast %49 : vector<4x4xf32> to vector<1x1x1x1x4x4xf32>
    tpu.vector_store %arg4[%c0_88, %c1_89, %c2_90, %c0_91, %c0_92, %c0_93], %52 {strides = array<i32>} : memref<1x4x4x4x4x4xf32, #tpu.memory_space<vmem>>, vector<1x1x1x1x4x4xf32>,
    %c2_94 = arith.constant 2 : index
    %c0_95 = arith.constant 0 : index
    %53 = tpu.strided_load %arg9[%c2_94, %c0_95] {strides = array<i32: 4, 1>} : memref<16x4xf32, #tpu.memory_space<vmem>>, vector<4x4xf32>
    %c0_96 = arith.constant 0 : index
    %c2_97 = arith.constant 2 : index
    %c2_98 = arith.constant 2 : index
    %c0_99 = arith.constant 0 : index
    %c0_100 = arith.constant 0 : index
    %c0_101 = arith.constant 0 : index
    %54 = vector.load %arg4[%c0_96, %c2_97, %c2_98, %c0_99, %c0_100, %c0_101] : memref<1x4x4x4x4x4xf32, #tpu.memory_space<vmem>>, vector<1x1x1x1x4x4xf32>
    %55 = vector.shape_cast %54 : vector<1x1x1x1x4x4xf32> to vector<4x4xf32>
    %56 = vector.shape_cast %53 : vector<4x4xf32> to vector<1x1x1x1x4x4xf32>
    tpu.vector_store %arg4[%c0_96, %c2_97, %c2_98, %c0_99, %c0_100, %c0_101], %56 {strides = array<i32>} : memref<1x4x4x4x4x4xf32, #tpu.memory_space<vmem>>, vector<1x1x1x1x4x4xf32>,
    %c3_102 = arith.constant 3 : index
    %c0_103 = arith.constant 0 : index
    %57 = tpu.strided_load %arg9[%c3_102, %c0_103] {strides = array<i32: 4, 1>} : memref<16x4xf32, #tpu.memory_space<vmem>>, vector<4x4xf32>
    %c0_104 = arith.constant 0 : index
    %c3_105 = arith.constant 3 : index
    %c2_106 = arith.constant 2 : index
    %c0_107 = arith.constant 0 : index
    %c0_108 = arith.constant 0 : index
    %c0_109 = arith.constant 0 : index
    %58 = vector.load %arg4[%c0_104, %c3_105, %c2_106, %c0_107, %c0_108, %c0_109] : memref<1x4x4x4x4x4xf32, #tpu.memory_space<vmem>>, vector<1x1x1x1x4x4xf32>
    %59 = vector.shape_cast %58 : vector<1x1x1x1x4x4xf32> to vector<4x4xf32>
    %60 = vector.shape_cast %57 : vector<4x4xf32> to vector<1x1x1x1x4x4xf32>
    tpu.vector_store %arg4[%c0_104, %c3_105, %c2_106, %c0_107, %c0_108, %c0_109], %60 {strides = array<i32>} : memref<1x4x4x4x4x4xf32, #tpu.memory_space<vmem>>, vector<1x1x1x1x4x4xf32>,
    %c3_110 = arith.constant 3 : index
    %c0_111 = arith.constant 0 : index
    %61 = tpu.strided_load %arg5[%c3_110, %c0_111] {strides = array<i32: 4, 1>} : memref<16x16xf32, #tpu.memory_space<vmem>>, vector<4x16xf32>
    %62 = tpu.transpose %61, [1, 0] : vector<4x16xf32> -> vector<16x4xf32>
    %c0_112 = arith.constant 0 : index
    %c0_113 = arith.constant 0 : index
    %63 = vector.load %arg10[%c0_112, %c0_113] : memref<16x4xf32, #tpu.memory_space<vmem>>, vector<16x4xf32>
    tpu.vector_store %arg10[%c0_112, %c0_113], %62 {strides = array<i32>} : memref<16x4xf32, #tpu.memory_space<vmem>>, vector<16x4xf32>,
    %c0_114 = arith.constant 0 : index
    %c0_115 = arith.constant 0 : index
    %64 = tpu.strided_load %arg10[%c0_114, %c0_115] {strides = array<i32: 4, 1>} : memref<16x4xf32, #tpu.memory_space<vmem>>, vector<4x4xf32>
    %c0_116 = arith.constant 0 : index
    %c0_117 = arith.constant 0 : index
    %c3_118 = arith.constant 3 : index
    %c0_119 = arith.constant 0 : index
    %c0_120 = arith.constant 0 : index
    %c0_121 = arith.constant 0 : index
    %65 = vector.load %arg4[%c0_116, %c0_117, %c3_118, %c0_119, %c0_120, %c0_121] : memref<1x4x4x4x4x4xf32, #tpu.memory_space<vmem>>, vector<1x1x1x1x4x4xf32>
    %66 = vector.shape_cast %65 : vector<1x1x1x1x4x4xf32> to vector<4x4xf32>
    %67 = vector.shape_cast %64 : vector<4x4xf32> to vector<1x1x1x1x4x4xf32>
    tpu.vector_store %arg4[%c0_116, %c0_117, %c3_118, %c0_119, %c0_120, %c0_121], %67 {strides = array<i32>} : memref<1x4x4x4x4x4xf32, #tpu.memory_space<vmem>>, vector<1x1x1x1x4x4xf32>,
    %c1_122 = arith.constant 1 : index
    %c0_123 = arith.constant 0 : index
    %68 = tpu.strided_load %arg10[%c1_122, %c0_123] {strides = array<i32: 4, 1>} : memref<16x4xf32, #tpu.memory_space<vmem>>, vector<4x4xf32>
    %c0_124 = arith.constant 0 : index
    %c1_125 = arith.constant 1 : index
    %c3_126 = arith.constant 3 : index
    %c0_127 = arith.constant 0 : index
    %c0_128 = arith.constant 0 : index
    %c0_129 = arith.constant 0 : index
    %69 = vector.load %arg4[%c0_124, %c1_125, %c3_126, %c0_127, %c0_128, %c0_129] : memref<1x4x4x4x4x4xf32, #tpu.memory_space<vmem>>, vector<1x1x1x1x4x4xf32>
    %70 = vector.shape_cast %69 : vector<1x1x1x1x4x4xf32> to vector<4x4xf32>
    %71 = vector.shape_cast %68 : vector<4x4xf32> to vector<1x1x1x1x4x4xf32>
    tpu.vector_store %arg4[%c0_124, %c1_125, %c3_126, %c0_127, %c0_128, %c0_129], %71 {strides = array<i32>} : memref<1x4x4x4x4x4xf32, #tpu.memory_space<vmem>>, vector<1x1x1x1x4x4xf32>,
    %c2_130 = arith.constant 2 : index
    %c0_131 = arith.constant 0 : index
    %72 = tpu.strided_load %arg10[%c2_130, %c0_131] {strides = array<i32: 4, 1>} : memref<16x4xf32, #tpu.memory_space<vmem>>, vector<4x4xf32>
    %c0_132 = arith.constant 0 : index
    %c2_133 = arith.constant 2 : index
    %c3_134 = arith.constant 3 : index
    %c0_135 = arith.constant 0 : index
    %c0_136 = arith.constant 0 : index
    %c0_137 = arith.constant 0 : index
    %73 = vector.load %arg4[%c0_132, %c2_133, %c3_134, %c0_135, %c0_136, %c0_137] : memref<1x4x4x4x4x4xf32, #tpu.memory_space<vmem>>, vector<1x1x1x1x4x4xf32>
    %74 = vector.shape_cast %73 : vector<1x1x1x1x4x4xf32> to vector<4x4xf32>
    %75 = vector.shape_cast %72 : vector<4x4xf32> to vector<1x1x1x1x4x4xf32>
    tpu.vector_store %arg4[%c0_132, %c2_133, %c3_134, %c0_135, %c0_136, %c0_137], %75 {strides = array<i32>} : memref<1x4x4x4x4x4xf32, #tpu.memory_space<vmem>>, vector<1x1x1x1x4x4xf32>,
    %c3_138 = arith.constant 3 : index
    %c0_139 = arith.constant 0 : index
    %76 = tpu.strided_load %arg10[%c3_138, %c0_139] {strides = array<i32: 4, 1>} : memref<16x4xf32, #tpu.memory_space<vmem>>, vector<4x4xf32>
    %c0_140 = arith.constant 0 : index
    %c3_141 = arith.constant 3 : index
    %c3_142 = arith.constant 3 : index
    %c0_143 = arith.constant 0 : index
    %c0_144 = arith.constant 0 : index
    %c0_145 = arith.constant 0 : index
    %77 = vector.load %arg4[%c0_140, %c3_141, %c3_142, %c0_143, %c0_144, %c0_145] : memref<1x4x4x4x4x4xf32, #tpu.memory_space<vmem>>, vector<1x1x1x1x4x4xf32>
    %78 = vector.shape_cast %77 : vector<1x1x1x1x4x4xf32> to vector<4x4xf32>
    %79 = vector.shape_cast %76 : vector<4x4xf32> to vector<1x1x1x1x4x4xf32>
    tpu.vector_store %arg4[%c0_140, %c3_141, %c3_142, %c0_143, %c0_144, %c0_145], %79 {strides = array<i32>} : memref<1x4x4x4x4x4xf32, #tpu.memory_space<vmem>>, vector<1x1x1x1x4x4xf32>,
    %c0_146 = arith.constant 0 : index
    %c1_147 = arith.constant 1 : index
    %c0_148 = arith.constant 0 : index
    %c0_149 = arith.constant 0 : index
    %80 = vector.load %arg3[%c0_146, %c1_147, %c0_148, %c0_149] : memref<1x4x16x16xf32, #tpu.memory_space<vmem>>, vector<1x1x16x16xf32>
    %81 = vector.shape_cast %80 : vector<1x1x16x16xf32> to vector<16x16xf32>
    %82 = tpu.transpose %81, [1, 0] : vector<16x16xf32> -> vector<16x16xf32>
    %c0_150 = arith.constant 0 : index
    %c0_151 = arith.constant 0 : index
    %83 = vector.load %arg6[%c0_150, %c0_151] : memref<16x16xf32, #tpu.memory_space<vmem>>, vector<16x16xf32>
    tpu.vector_store %arg6[%c0_150, %c0_151], %82 {strides = array<i32>} : memref<16x16xf32, #tpu.memory_space<vmem>>, vector<16x16xf32>,
    %c0_152 = arith.constant 0 : index
    %c0_153 = arith.constant 0 : index
    %84 = tpu.strided_load %arg6[%c0_152, %c0_153] {strides = array<i32: 4, 1>} : memref<16x16xf32, #tpu.memory_space<vmem>>, vector<4x16xf32>
    %85 = tpu.transpose %84, [1, 0] : vector<4x16xf32> -> vector<16x4xf32>
    %c0_154 = arith.constant 0 : index
    %c0_155 = arith.constant 0 : index
    %86 = vector.load %arg7[%c0_154, %c0_155] : memref<16x4xf32, #tpu.memory_space<vmem>>, vector<16x4xf32>
    tpu.vector_store %arg7[%c0_154, %c0_155], %85 {strides = array<i32>} : memref<16x4xf32, #tpu.memory_space<vmem>>, vector<16x4xf32>,
    %c0_156 = arith.constant 0 : index
    %c0_157 = arith.constant 0 : index
    %87 = tpu.strided_load %arg7[%c0_156, %c0_157] {strides = array<i32: 4, 1>} : memref<16x4xf32, #tpu.memory_space<vmem>>, vector<4x4xf32>
    %c0_158 = arith.constant 0 : index
    %c0_159 = arith.constant 0 : index
    %c0_160 = arith.constant 0 : index
    %c1_161 = arith.constant 1 : index
    %c0_162 = arith.constant 0 : index
    %c0_163 = arith.constant 0 : index
    %88 = vector.load %arg4[%c0_158, %c0_159, %c0_160, %c1_161, %c0_162, %c0_163] : memref<1x4x4x4x4x4xf32, #tpu.memory_space<vmem>>, vector<1x1x1x1x4x4xf32>
    %89 = vector.shape_cast %88 : vector<1x1x1x1x4x4xf32> to vector<4x4xf32>
    %90 = vector.shape_cast %87 : vector<4x4xf32> to vector<1x1x1x1x4x4xf32>
    tpu.vector_store %arg4[%c0_158, %c0_159, %c0_160, %c1_161, %c0_162, %c0_163], %90 {strides = array<i32>} : memref<1x4x4x4x4x4xf32, #tpu.memory_space<vmem>>, vector<1x1x1x1x4x4xf32>,
    %c1_164 = arith.constant 1 : index
    %c0_165 = arith.constant 0 : index
    %91 = tpu.strided_load %arg7[%c1_164, %c0_165] {strides = array<i32: 4, 1>} : memref<16x4xf32, #tpu.memory_space<vmem>>, vector<4x4xf32>
    %c0_166 = arith.constant 0 : index
    %c1_167 = arith.constant 1 : index
    %c0_168 = arith.constant 0 : index
    %c1_169 = arith.constant 1 : index
    %c0_170 = arith.constant 0 : index
    %c0_171 = arith.constant 0 : index
    %92 = vector.load %arg4[%c0_166, %c1_167, %c0_168, %c1_169, %c0_170, %c0_171] : memref<1x4x4x4x4x4xf32, #tpu.memory_space<vmem>>, vector<1x1x1x1x4x4xf32>
    %93 = vector.shape_cast %92 : vector<1x1x1x1x4x4xf32> to vector<4x4xf32>
    %94 = vector.shape_cast %91 : vector<4x4xf32> to vector<1x1x1x1x4x4xf32>
    tpu.vector_store %arg4[%c0_166, %c1_167, %c0_168, %c1_169, %c0_170, %c0_171], %94 {strides = array<i32>} : memref<1x4x4x4x4x4xf32, #tpu.memory_space<vmem>>, vector<1x1x1x1x4x4xf32>,
    %c2_172 = arith.constant 2 : index
    %c0_173 = arith.constant 0 : index
    %95 = tpu.strided_load %arg7[%c2_172, %c0_173] {strides = array<i32: 4, 1>} : memref<16x4xf32, #tpu.memory_space<vmem>>, vector<4x4xf32>
    %c0_174 = arith.constant 0 : index
    %c2_175 = arith.constant 2 : index
    %c0_176 = arith.constant 0 : index
    %c1_177 = arith.constant 1 : index
    %c0_178 = arith.constant 0 : index
    %c0_179 = arith.constant 0 : index
    %96 = vector.load %arg4[%c0_174, %c2_175, %c0_176, %c1_177, %c0_178, %c0_179] : memref<1x4x4x4x4x4xf32, #tpu.memory_space<vmem>>, vector<1x1x1x1x4x4xf32>
    %97 = vector.shape_cast %96 : vector<1x1x1x1x4x4xf32> to vector<4x4xf32>
    %98 = vector.shape_cast %95 : vector<4x4xf32> to vector<1x1x1x1x4x4xf32>
    tpu.vector_store %arg4[%c0_174, %c2_175, %c0_176, %c1_177, %c0_178, %c0_179], %98 {strides = array<i32>} : memref<1x4x4x4x4x4xf32, #tpu.memory_space<vmem>>, vector<1x1x1x1x4x4xf32>,
    %c3_180 = arith.constant 3 : index
    %c0_181 = arith.constant 0 : index
    %99 = tpu.strided_load %arg7[%c3_180, %c0_181] {strides = array<i32: 4, 1>} : memref<16x4xf32, #tpu.memory_space<vmem>>, vector<4x4xf32>
    %c0_182 = arith.constant 0 : index
    %c3_183 = arith.constant 3 : index
    %c0_184 = arith.constant 0 : index
    %c1_185 = arith.constant 1 : index
    %c0_186 = arith.constant 0 : index
    %c0_187 = arith.constant 0 : index
    %100 = vector.load %arg4[%c0_182, %c3_183, %c0_184, %c1_185, %c0_186, %c0_187] : memref<1x4x4x4x4x4xf32, #tpu.memory_space<vmem>>, vector<1x1x1x1x4x4xf32>
    %101 = vector.shape_cast %100 : vector<1x1x1x1x4x4xf32> to vector<4x4xf32>
    %102 = vector.shape_cast %99 : vector<4x4xf32> to vector<1x1x1x1x4x4xf32>
    tpu.vector_store %arg4[%c0_182, %c3_183, %c0_184, %c1_185, %c0_186, %c0_187], %102 {strides = array<i32>} : memref<1x4x4x4x4x4xf32, #tpu.memory_space<vmem>>, vector<1x1x1x1x4x4xf32>,
    %c1_188 = arith.constant 1 : index
    %c0_189 = arith.constant 0 : index
    %103 = tpu.strided_load %arg6[%c1_188, %c0_189] {strides = array<i32: 4, 1>} : memref<16x16xf32, #tpu.memory_space<vmem>>, vector<4x16xf32>
    %104 = tpu.transpose %103, [1, 0] : vector<4x16xf32> -> vector<16x4xf32>
    %c0_190 = arith.constant 0 : index
    %c0_191 = arith.constant 0 : index
    %105 = vector.load %arg8[%c0_190, %c0_191] : memref<16x4xf32, #tpu.memory_space<vmem>>, vector<16x4xf32>
    tpu.vector_store %arg8[%c0_190, %c0_191], %104 {strides = array<i32>} : memref<16x4xf32, #tpu.memory_space<vmem>>, vector<16x4xf32>,
    %c0_192 = arith.constant 0 : index
    %c0_193 = arith.constant 0 : index
    %106 = tpu.strided_load %arg8[%c0_192, %c0_193] {strides = array<i32: 4, 1>} : memref<16x4xf32, #tpu.memory_space<vmem>>, vector<4x4xf32>
    %c0_194 = arith.constant 0 : index
    %c0_195 = arith.constant 0 : index
    %c1_196 = arith.constant 1 : index
    %c1_197 = arith.constant 1 : index
    %c0_198 = arith.constant 0 : index
    %c0_199 = arith.constant 0 : index
    %107 = vector.load %arg4[%c0_194, %c0_195, %c1_196, %c1_197, %c0_198, %c0_199] : memref<1x4x4x4x4x4xf32, #tpu.memory_space<vmem>>, vector<1x1x1x1x4x4xf32>
    %108 = vector.shape_cast %107 : vector<1x1x1x1x4x4xf32> to vector<4x4xf32>
    %109 = vector.shape_cast %106 : vector<4x4xf32> to vector<1x1x1x1x4x4xf32>
    tpu.vector_store %arg4[%c0_194, %c0_195, %c1_196, %c1_197, %c0_198, %c0_199], %109 {strides = array<i32>} : memref<1x4x4x4x4x4xf32, #tpu.memory_space<vmem>>, vector<1x1x1x1x4x4xf32>,
    %c1_200 = arith.constant 1 : index
    %c0_201 = arith.constant 0 : index
    %110 = tpu.strided_load %arg8[%c1_200, %c0_201] {strides = array<i32: 4, 1>} : memref<16x4xf32, #tpu.memory_space<vmem>>, vector<4x4xf32>
    %c0_202 = arith.constant 0 : index
    %c1_203 = arith.constant 1 : index
    %c1_204 = arith.constant 1 : index
    %c1_205 = arith.constant 1 : index
    %c0_206 = arith.constant 0 : index
    %c0_207 = arith.constant 0 : index
    %111 = vector.load %arg4[%c0_202, %c1_203, %c1_204, %c1_205, %c0_206, %c0_207] : memref<1x4x4x4x4x4xf32, #tpu.memory_space<vmem>>, vector<1x1x1x1x4x4xf32>
    %112 = vector.shape_cast %111 : vector<1x1x1x1x4x4xf32> to vector<4x4xf32>
    %113 = vector.shape_cast %110 : vector<4x4xf32> to vector<1x1x1x1x4x4xf32>
    tpu.vector_store %arg4[%c0_202, %c1_203, %c1_204, %c1_205, %c0_206, %c0_207], %113 {strides = array<i32>} : memref<1x4x4x4x4x4xf32, #tpu.memory_space<vmem>>, vector<1x1x1x1x4x4xf32>,
    %c2_208 = arith.constant 2 : index
    %c0_209 = arith.constant 0 : index
    %114 = tpu.strided_load %arg8[%c2_208, %c0_209] {strides = array<i32: 4, 1>} : memref<16x4xf32, #tpu.memory_space<vmem>>, vector<4x4xf32>
    %c0_210 = arith.constant 0 : index
    %c2_211 = arith.constant 2 : index
    %c1_212 = arith.constant 1 : index
    %c1_213 = arith.constant 1 : index
    %c0_214 = arith.constant 0 : index
    %c0_215 = arith.constant 0 : index
    %115 = vector.load %arg4[%c0_210, %c2_211, %c1_212, %c1_213, %c0_214, %c0_215] : memref<1x4x4x4x4x4xf32, #tpu.memory_space<vmem>>, vector<1x1x1x1x4x4xf32>
    %116 = vector.shape_cast %115 : vector<1x1x1x1x4x4xf32> to vector<4x4xf32>
    %117 = vector.shape_cast %114 : vector<4x4xf32> to vector<1x1x1x1x4x4xf32>
    tpu.vector_store %arg4[%c0_210, %c2_211, %c1_212, %c1_213, %c0_214, %c0_215], %117 {strides = array<i32>} : memref<1x4x4x4x4x4xf32, #tpu.memory_space<vmem>>, vector<1x1x1x1x4x4xf32>,
    %c3_216 = arith.constant 3 : index
    %c0_217 = arith.constant 0 : index
    %118 = tpu.strided_load %arg8[%c3_216, %c0_217] {strides = array<i32: 4, 1>} : memref<16x4xf32, #tpu.memory_space<vmem>>, vector<4x4xf32>
    %c0_218 = arith.constant 0 : index
    %c3_219 = arith.constant 3 : index
    %c1_220 = arith.constant 1 : index
    %c1_221 = arith.constant 1 : index
    %c0_222 = arith.constant 0 : index
    %c0_223 = arith.constant 0 : index
    %119 = vector.load %arg4[%c0_218, %c3_219, %c1_220, %c1_221, %c0_222, %c0_223] : memref<1x4x4x4x4x4xf32, #tpu.memory_space<vmem>>, vector<1x1x1x1x4x4xf32>
    %120 = vector.shape_cast %119 : vector<1x1x1x1x4x4xf32> to vector<4x4xf32>
    %121 = vector.shape_cast %118 : vector<4x4xf32> to vector<1x1x1x1x4x4xf32>
    tpu.vector_store %arg4[%c0_218, %c3_219, %c1_220, %c1_221, %c0_222, %c0_223], %121 {strides = array<i32>} : memref<1x4x4x4x4x4xf32, #tpu.memory_space<vmem>>, vector<1x1x1x1x4x4xf32>,
    %c2_224 = arith.constant 2 : index
    %c0_225 = arith.constant 0 : index
    %122 = tpu.strided_load %arg6[%c2_224, %c0_225] {strides = array<i32: 4, 1>} : memref<16x16xf32, #tpu.memory_space<vmem>>, vector<4x16xf32>
    %123 = tpu.transpose %122, [1, 0] : vector<4x16xf32> -> vector<16x4xf32>
    %c0_226 = arith.constant 0 : index
    %c0_227 = arith.constant 0 : index
    %124 = vector.load %arg9[%c0_226, %c0_227] : memref<16x4xf32, #tpu.memory_space<vmem>>, vector<16x4xf32>
    tpu.vector_store %arg9[%c0_226, %c0_227], %123 {strides = array<i32>} : memref<16x4xf32, #tpu.memory_space<vmem>>, vector<16x4xf32>,
    %c0_228 = arith.constant 0 : index
    %c0_229 = arith.constant 0 : index
    %125 = tpu.strided_load %arg9[%c0_228, %c0_229] {strides = array<i32: 4, 1>} : memref<16x4xf32, #tpu.memory_space<vmem>>, vector<4x4xf32>
    %c0_230 = arith.constant 0 : index
    %c0_231 = arith.constant 0 : index
    %c2_232 = arith.constant 2 : index
    %c1_233 = arith.constant 1 : index
    %c0_234 = arith.constant 0 : index
    %c0_235 = arith.constant 0 : index
    %126 = vector.load %arg4[%c0_230, %c0_231, %c2_232, %c1_233, %c0_234, %c0_235] : memref<1x4x4x4x4x4xf32, #tpu.memory_space<vmem>>, vector<1x1x1x1x4x4xf32>
    %127 = vector.shape_cast %126 : vector<1x1x1x1x4x4xf32> to vector<4x4xf32>
    %128 = vector.shape_cast %125 : vector<4x4xf32> to vector<1x1x1x1x4x4xf32>
    tpu.vector_store %arg4[%c0_230, %c0_231, %c2_232, %c1_233, %c0_234, %c0_235], %128 {strides = array<i32>} : memref<1x4x4x4x4x4xf32, #tpu.memory_space<vmem>>, vector<1x1x1x1x4x4xf32>,
    %c1_236 = arith.constant 1 : index
    %c0_237 = arith.constant 0 : index
    %129 = tpu.strided_load %arg9[%c1_236, %c0_237] {strides = array<i32: 4, 1>} : memref<16x4xf32, #tpu.memory_space<vmem>>, vector<4x4xf32>
    %c0_238 = arith.constant 0 : index
    %c1_239 = arith.constant 1 : index
    %c2_240 = arith.constant 2 : index
    %c1_241 = arith.constant 1 : index
    %c0_242 = arith.constant 0 : index
    %c0_243 = arith.constant 0 : index
    %130 = vector.load %arg4[%c0_238, %c1_239, %c2_240, %c1_241, %c0_242, %c0_243] : memref<1x4x4x4x4x4xf32, #tpu.memory_space<vmem>>, vector<1x1x1x1x4x4xf32>
    %131 = vector.shape_cast %130 : vector<1x1x1x1x4x4xf32> to vector<4x4xf32>
    %132 = vector.shape_cast %129 : vector<4x4xf32> to vector<1x1x1x1x4x4xf32>
    tpu.vector_store %arg4[%c0_238, %c1_239, %c2_240, %c1_241, %c0_242, %c0_243], %132 {strides = array<i32>} : memref<1x4x4x4x4x4xf32, #tpu.memory_space<vmem>>, vector<1x1x1x1x4x4xf32>,
    %c2_244 = arith.constant 2 : index
    %c0_245 = arith.constant 0 : index
    %133 = tpu.strided_load %arg9[%c2_244, %c0_245] {strides = array<i32: 4, 1>} : memref<16x4xf32, #tpu.memory_space<vmem>>, vector<4x4xf32>
    %c0_246 = arith.constant 0 : index
    %c2_247 = arith.constant 2 : index
    %c2_248 = arith.constant 2 : index
    %c1_249 = arith.constant 1 : index
    %c0_250 = arith.constant 0 : index
    %c0_251 = arith.constant 0 : index
    %134 = vector.load %arg4[%c0_246, %c2_247, %c2_248, %c1_249, %c0_250, %c0_251] : memref<1x4x4x4x4x4xf32, #tpu.memory_space<vmem>>, vector<1x1x1x1x4x4xf32>
    %135 = vector.shape_cast %134 : vector<1x1x1x1x4x4xf32> to vector<4x4xf32>
    %136 = vector.shape_cast %133 : vector<4x4xf32> to vector<1x1x1x1x4x4xf32>
    tpu.vector_store %arg4[%c0_246, %c2_247, %c2_248, %c1_249, %c0_250, %c0_251], %136 {strides = array<i32>} : memref<1x4x4x4x4x4xf32, #tpu.memory_space<vmem>>, vector<1x1x1x1x4x4xf32>,
    %c3_252 = arith.constant 3 : index
    %c0_253 = arith.constant 0 : index
    %137 = tpu.strided_load %arg9[%c3_252, %c0_253] {strides = array<i32: 4, 1>} : memref<16x4xf32, #tpu.memory_space<vmem>>, vector<4x4xf32>
    %c0_254 = arith.constant 0 : index
    %c3_255 = arith.constant 3 : index
    %c2_256 = arith.constant 2 : index
    %c1_257 = arith.constant 1 : index
    %c0_258 = arith.constant 0 : index
    %c0_259 = arith.constant 0 : index
    %138 = vector.load %arg4[%c0_254, %c3_255, %c2_256, %c1_257, %c0_258, %c0_259] : memref<1x4x4x4x4x4xf32, #tpu.memory_space<vmem>>, vector<1x1x1x1x4x4xf32>
    %139 = vector.shape_cast %138 : vector<1x1x1x1x4x4xf32> to vector<4x4xf32>
    %140 = vector.shape_cast %137 : vector<4x4xf32> to vector<1x1x1x1x4x4xf32>
    tpu.vector_store %arg4[%c0_254, %c3_255, %c2_256, %c1_257, %c0_258, %c0_259], %140 {strides = array<i32>} : memref<1x4x4x4x4x4xf32, #tpu.memory_space<vmem>>, vector<1x1x1x1x4x4xf32>,
    %c3_260 = arith.constant 3 : index
    %c0_261 = arith.constant 0 : index
    %141 = tpu.strided_load %arg6[%c3_260, %c0_261] {strides = array<i32: 4, 1>} : memref<16x16xf32, #tpu.memory_space<vmem>>, vector<4x16xf32>
    %142 = tpu.transpose %141, [1, 0] : vector<4x16xf32> -> vector<16x4xf32>
    %c0_262 = arith.constant 0 : index
    %c0_263 = arith.constant 0 : index
    %143 = vector.load %arg10[%c0_262, %c0_263] : memref<16x4xf32, #tpu.memory_space<vmem>>, vector<16x4xf32>
    tpu.vector_store %arg10[%c0_262, %c0_263], %142 {strides = array<i32>} : memref<16x4xf32, #tpu.memory_space<vmem>>, vector<16x4xf32>,
    %c0_264 = arith.constant 0 : index
    %c0_265 = arith.constant 0 : index
    %144 = tpu.strided_load %arg10[%c0_264, %c0_265] {strides = array<i32: 4, 1>} : memref<16x4xf32, #tpu.memory_space<vmem>>, vector<4x4xf32>
    %c0_266 = arith.constant 0 : index
    %c0_267 = arith.constant 0 : index
    %c3_268 = arith.constant 3 : index
    %c1_269 = arith.constant 1 : index
    %c0_270 = arith.constant 0 : index
    %c0_271 = arith.constant 0 : index
    %145 = vector.load %arg4[%c0_266, %c0_267, %c3_268, %c1_269, %c0_270, %c0_271] : memref<1x4x4x4x4x4xf32, #tpu.memory_space<vmem>>, vector<1x1x1x1x4x4xf32>
    %146 = vector.shape_cast %145 : vector<1x1x1x1x4x4xf32> to vector<4x4xf32>
    %147 = vector.shape_cast %144 : vector<4x4xf32> to vector<1x1x1x1x4x4xf32>
    tpu.vector_store %arg4[%c0_266, %c0_267, %c3_268, %c1_269, %c0_270, %c0_271], %147 {strides = array<i32>} : memref<1x4x4x4x4x4xf32, #tpu.memory_space<vmem>>, vector<1x1x1x1x4x4xf32>,
    %c1_272 = arith.constant 1 : index
    %c0_273 = arith.constant 0 : index
    %148 = tpu.strided_load %arg10[%c1_272, %c0_273] {strides = array<i32: 4, 1>} : memref<16x4xf32, #tpu.memory_space<vmem>>, vector<4x4xf32>
    %c0_274 = arith.constant 0 : index
    %c1_275 = arith.constant 1 : index
    %c3_276 = arith.constant 3 : index
    %c1_277 = arith.constant 1 : index
    %c0_278 = arith.constant 0 : index
    %c0_279 = arith.constant 0 : index
    %149 = vector.load %arg4[%c0_274, %c1_275, %c3_276, %c1_277, %c0_278, %c0_279] : memref<1x4x4x4x4x4xf32, #tpu.memory_space<vmem>>, vector<1x1x1x1x4x4xf32>
    %150 = vector.shape_cast %149 : vector<1x1x1x1x4x4xf32> to vector<4x4xf32>
    %151 = vector.shape_cast %148 : vector<4x4xf32> to vector<1x1x1x1x4x4xf32>
    tpu.vector_store %arg4[%c0_274, %c1_275, %c3_276, %c1_277, %c0_278, %c0_279], %151 {strides = array<i32>} : memref<1x4x4x4x4x4xf32, #tpu.memory_space<vmem>>, vector<1x1x1x1x4x4xf32>,
    %c2_280 = arith.constant 2 : index
    %c0_281 = arith.constant 0 : index
    %152 = tpu.strided_load %arg10[%c2_280, %c0_281] {strides = array<i32: 4, 1>} : memref<16x4xf32, #tpu.memory_space<vmem>>, vector<4x4xf32>
    %c0_282 = arith.constant 0 : index
    %c2_283 = arith.constant 2 : index
    %c3_284 = arith.constant 3 : index
    %c1_285 = arith.constant 1 : index
    %c0_286 = arith.constant 0 : index
    %c0_287 = arith.constant 0 : index
    %153 = vector.load %arg4[%c0_282, %c2_283, %c3_284, %c1_285, %c0_286, %c0_287] : memref<1x4x4x4x4x4xf32, #tpu.memory_space<vmem>>, vector<1x1x1x1x4x4xf32>
    %154 = vector.shape_cast %153 : vector<1x1x1x1x4x4xf32> to vector<4x4xf32>
    %155 = vector.shape_cast %152 : vector<4x4xf32> to vector<1x1x1x1x4x4xf32>
    tpu.vector_store %arg4[%c0_282, %c2_283, %c3_284, %c1_285, %c0_286, %c0_287], %155 {strides = array<i32>} : memref<1x4x4x4x4x4xf32, #tpu.memory_space<vmem>>, vector<1x1x1x1x4x4xf32>,
    %c3_288 = arith.constant 3 : index
    %c0_289 = arith.constant 0 : index
    %156 = tpu.strided_load %arg10[%c3_288, %c0_289] {strides = array<i32: 4, 1>} : memref<16x4xf32, #tpu.memory_space<vmem>>, vector<4x4xf32>
    %c0_290 = arith.constant 0 : index
    %c3_291 = arith.constant 3 : index
    %c3_292 = arith.constant 3 : index
    %c1_293 = arith.constant 1 : index
    %c0_294 = arith.constant 0 : index
    %c0_295 = arith.constant 0 : index
    %157 = vector.load %arg4[%c0_290, %c3_291, %c3_292, %c1_293, %c0_294, %c0_295] : memref<1x4x4x4x4x4xf32, #tpu.memory_space<vmem>>, vector<1x1x1x1x4x4xf32>
    %158 = vector.shape_cast %157 : vector<1x1x1x1x4x4xf32> to vector<4x4xf32>
    %159 = vector.shape_cast %156 : vector<4x4xf32> to vector<1x1x1x1x4x4xf32>
    tpu.vector_store %arg4[%c0_290, %c3_291, %c3_292, %c1_293, %c0_294, %c0_295], %159 {strides = array<i32>} : memref<1x4x4x4x4x4xf32, #tpu.memory_space<vmem>>, vector<1x1x1x1x4x4xf32>,
    %c0_296 = arith.constant 0 : index
    %c2_297 = arith.constant 2 : index
    %c0_298 = arith.constant 0 : index
    %c0_299 = arith.constant 0 : index
    %160 = vector.load %arg3[%c0_296, %c2_297, %c0_298, %c0_299] : memref<1x4x16x16xf32, #tpu.memory_space<vmem>>, vector<1x1x16x16xf32>
    %161 = vector.shape_cast %160 : vector<1x1x16x16xf32> to vector<16x16xf32>
    %162 = tpu.transpose %161, [1, 0] : vector<16x16xf32> -> vector<16x16xf32>
    %c0_300 = arith.constant 0 : index
    %c0_301 = arith.constant 0 : index
    %163 = vector.load %arg5[%c0_300, %c0_301] : memref<16x16xf32, #tpu.memory_space<vmem>>, vector<16x16xf32>
    tpu.vector_store %arg5[%c0_300, %c0_301], %162 {strides = array<i32>} : memref<16x16xf32, #tpu.memory_space<vmem>>, vector<16x16xf32>,
    %c0_302 = arith.constant 0 : index
    %c0_303 = arith.constant 0 : index
    %164 = tpu.strided_load %arg5[%c0_302, %c0_303] {strides = array<i32: 4, 1>} : memref<16x16xf32, #tpu.memory_space<vmem>>, vector<4x16xf32>
    %165 = tpu.transpose %164, [1, 0] : vector<4x16xf32> -> vector<16x4xf32>
    %c0_304 = arith.constant 0 : index
    %c0_305 = arith.constant 0 : index
    %166 = vector.load %arg7[%c0_304, %c0_305] : memref<16x4xf32, #tpu.memory_space<vmem>>, vector<16x4xf32>
    tpu.vector_store %arg7[%c0_304, %c0_305], %165 {strides = array<i32>} : memref<16x4xf32, #tpu.memory_space<vmem>>, vector<16x4xf32>,
    %c0_306 = arith.constant 0 : index
    %c0_307 = arith.constant 0 : index
    %167 = tpu.strided_load %arg7[%c0_306, %c0_307] {strides = array<i32: 4, 1>} : memref<16x4xf32, #tpu.memory_space<vmem>>, vector<4x4xf32>
    %c0_308 = arith.constant 0 : index
    %c0_309 = arith.constant 0 : index
    %c0_310 = arith.constant 0 : index
    %c2_311 = arith.constant 2 : index
    %c0_312 = arith.constant 0 : index
    %c0_313 = arith.constant 0 : index
    %168 = vector.load %arg4[%c0_308, %c0_309, %c0_310, %c2_311, %c0_312, %c0_313] : memref<1x4x4x4x4x4xf32, #tpu.memory_space<vmem>>, vector<1x1x1x1x4x4xf32>
    %169 = vector.shape_cast %168 : vector<1x1x1x1x4x4xf32> to vector<4x4xf32>
    %170 = vector.shape_cast %167 : vector<4x4xf32> to vector<1x1x1x1x4x4xf32>
    tpu.vector_store %arg4[%c0_308, %c0_309, %c0_310, %c2_311, %c0_312, %c0_313], %170 {strides = array<i32>} : memref<1x4x4x4x4x4xf32, #tpu.memory_space<vmem>>, vector<1x1x1x1x4x4xf32>,
    %c1_314 = arith.constant 1 : index
    %c0_315 = arith.constant 0 : index
    %171 = tpu.strided_load %arg7[%c1_314, %c0_315] {strides = array<i32: 4, 1>} : memref<16x4xf32, #tpu.memory_space<vmem>>, vector<4x4xf32>
    %c0_316 = arith.constant 0 : index
    %c1_317 = arith.constant 1 : index
    %c0_318 = arith.constant 0 : index
    %c2_319 = arith.constant 2 : index
    %c0_320 = arith.constant 0 : index
    %c0_321 = arith.constant 0 : index
    %172 = vector.load %arg4[%c0_316, %c1_317, %c0_318, %c2_319, %c0_320, %c0_321] : memref<1x4x4x4x4x4xf32, #tpu.memory_space<vmem>>, vector<1x1x1x1x4x4xf32>
    %173 = vector.shape_cast %172 : vector<1x1x1x1x4x4xf32> to vector<4x4xf32>
    %174 = vector.shape_cast %171 : vector<4x4xf32> to vector<1x1x1x1x4x4xf32>
    tpu.vector_store %arg4[%c0_316, %c1_317, %c0_318, %c2_319, %c0_320, %c0_321], %174 {strides = array<i32>} : memref<1x4x4x4x4x4xf32, #tpu.memory_space<vmem>>, vector<1x1x1x1x4x4xf32>,
    %c2_322 = arith.constant 2 : index
    %c0_323 = arith.constant 0 : index
    %175 = tpu.strided_load %arg7[%c2_322, %c0_323] {strides = array<i32: 4, 1>} : memref<16x4xf32, #tpu.memory_space<vmem>>, vector<4x4xf32>
    %c0_324 = arith.constant 0 : index
    %c2_325 = arith.constant 2 : index
    %c0_326 = arith.constant 0 : index
    %c2_327 = arith.constant 2 : index
    %c0_328 = arith.constant 0 : index
    %c0_329 = arith.constant 0 : index
    %176 = vector.load %arg4[%c0_324, %c2_325, %c0_326, %c2_327, %c0_328, %c0_329] : memref<1x4x4x4x4x4xf32, #tpu.memory_space<vmem>>, vector<1x1x1x1x4x4xf32>
    %177 = vector.shape_cast %176 : vector<1x1x1x1x4x4xf32> to vector<4x4xf32>
    %178 = vector.shape_cast %175 : vector<4x4xf32> to vector<1x1x1x1x4x4xf32>
    tpu.vector_store %arg4[%c0_324, %c2_325, %c0_326, %c2_327, %c0_328, %c0_329], %178 {strides = array<i32>} : memref<1x4x4x4x4x4xf32, #tpu.memory_space<vmem>>, vector<1x1x1x1x4x4xf32>,
    %c3_330 = arith.constant 3 : index
    %c0_331 = arith.constant 0 : index
    %179 = tpu.strided_load %arg7[%c3_330, %c0_331] {strides = array<i32: 4, 1>} : memref<16x4xf32, #tpu.memory_space<vmem>>, vector<4x4xf32>
    %c0_332 = arith.constant 0 : index
    %c3_333 = arith.constant 3 : index
    %c0_334 = arith.constant 0 : index
    %c2_335 = arith.constant 2 : index
    %c0_336 = arith.constant 0 : index
    %c0_337 = arith.constant 0 : index
    %180 = vector.load %arg4[%c0_332, %c3_333, %c0_334, %c2_335, %c0_336, %c0_337] : memref<1x4x4x4x4x4xf32, #tpu.memory_space<vmem>>, vector<1x1x1x1x4x4xf32>
    %181 = vector.shape_cast %180 : vector<1x1x1x1x4x4xf32> to vector<4x4xf32>
    %182 = vector.shape_cast %179 : vector<4x4xf32> to vector<1x1x1x1x4x4xf32>
    tpu.vector_store %arg4[%c0_332, %c3_333, %c0_334, %c2_335, %c0_336, %c0_337], %182 {strides = array<i32>} : memref<1x4x4x4x4x4xf32, #tpu.memory_space<vmem>>, vector<1x1x1x1x4x4xf32>,
    %c1_338 = arith.constant 1 : index
    %c0_339 = arith.constant 0 : index
    %183 = tpu.strided_load %arg5[%c1_338, %c0_339] {strides = array<i32: 4, 1>} : memref<16x16xf32, #tpu.memory_space<vmem>>, vector<4x16xf32>
    %184 = tpu.transpose %183, [1, 0] : vector<4x16xf32> -> vector<16x4xf32>
    %c0_340 = arith.constant 0 : index
    %c0_341 = arith.constant 0 : index
    %185 = vector.load %arg8[%c0_340, %c0_341] : memref<16x4xf32, #tpu.memory_space<vmem>>, vector<16x4xf32>
    tpu.vector_store %arg8[%c0_340, %c0_341], %184 {strides = array<i32>} : memref<16x4xf32, #tpu.memory_space<vmem>>, vector<16x4xf32>,
    %c0_342 = arith.constant 0 : index
    %c0_343 = arith.constant 0 : index
    %186 = tpu.strided_load %arg8[%c0_342, %c0_343] {strides = array<i32: 4, 1>} : memref<16x4xf32, #tpu.memory_space<vmem>>, vector<4x4xf32>
    %c0_344 = arith.constant 0 : index
    %c0_345 = arith.constant 0 : index
    %c1_346 = arith.constant 1 : index
    %c2_347 = arith.constant 2 : index
    %c0_348 = arith.constant 0 : index
    %c0_349 = arith.constant 0 : index
    %187 = vector.load %arg4[%c0_344, %c0_345, %c1_346, %c2_347, %c0_348, %c0_349] : memref<1x4x4x4x4x4xf32, #tpu.memory_space<vmem>>, vector<1x1x1x1x4x4xf32>
    %188 = vector.shape_cast %187 : vector<1x1x1x1x4x4xf32> to vector<4x4xf32>
    %189 = vector.shape_cast %186 : vector<4x4xf32> to vector<1x1x1x1x4x4xf32>
    tpu.vector_store %arg4[%c0_344, %c0_345, %c1_346, %c2_347, %c0_348, %c0_349], %189 {strides = array<i32>} : memref<1x4x4x4x4x4xf32, #tpu.memory_space<vmem>>, vector<1x1x1x1x4x4xf32>,
    %c1_350 = arith.constant 1 : index
    %c0_351 = arith.constant 0 : index
    %190 = tpu.strided_load %arg8[%c1_350, %c0_351] {strides = array<i32: 4, 1>} : memref<16x4xf32, #tpu.memory_space<vmem>>, vector<4x4xf32>
    %c0_352 = arith.constant 0 : index
    %c1_353 = arith.constant 1 : index
    %c1_354 = arith.constant 1 : index
    %c2_355 = arith.constant 2 : index
    %c0_356 = arith.constant 0 : index
    %c0_357 = arith.constant 0 : index
    %191 = vector.load %arg4[%c0_352, %c1_353, %c1_354, %c2_355, %c0_356, %c0_357] : memref<1x4x4x4x4x4xf32, #tpu.memory_space<vmem>>, vector<1x1x1x1x4x4xf32>
    %192 = vector.shape_cast %191 : vector<1x1x1x1x4x4xf32> to vector<4x4xf32>
    %193 = vector.shape_cast %190 : vector<4x4xf32> to vector<1x1x1x1x4x4xf32>
    tpu.vector_store %arg4[%c0_352, %c1_353, %c1_354, %c2_355, %c0_356, %c0_357], %193 {strides = array<i32>} : memref<1x4x4x4x4x4xf32, #tpu.memory_space<vmem>>, vector<1x1x1x1x4x4xf32>,
    %c2_358 = arith.constant 2 : index
    %c0_359 = arith.constant 0 : index
    %194 = tpu.strided_load %arg8[%c2_358, %c0_359] {strides = array<i32: 4, 1>} : memref<16x4xf32, #tpu.memory_space<vmem>>, vector<4x4xf32>
    %c0_360 = arith.constant 0 : index
    %c2_361 = arith.constant 2 : index
    %c1_362 = arith.constant 1 : index
    %c2_363 = arith.constant 2 : index
    %c0_364 = arith.constant 0 : index
    %c0_365 = arith.constant 0 : index
    %195 = vector.load %arg4[%c0_360, %c2_361, %c1_362, %c2_363, %c0_364, %c0_365] : memref<1x4x4x4x4x4xf32, #tpu.memory_space<vmem>>, vector<1x1x1x1x4x4xf32>
    %196 = vector.shape_cast %195 : vector<1x1x1x1x4x4xf32> to vector<4x4xf32>
    %197 = vector.shape_cast %194 : vector<4x4xf32> to vector<1x1x1x1x4x4xf32>
    tpu.vector_store %arg4[%c0_360, %c2_361, %c1_362, %c2_363, %c0_364, %c0_365], %197 {strides = array<i32>} : memref<1x4x4x4x4x4xf32, #tpu.memory_space<vmem>>, vector<1x1x1x1x4x4xf32>,
    %c3_366 = arith.constant 3 : index
    %c0_367 = arith.constant 0 : index
    %198 = tpu.strided_load %arg8[%c3_366, %c0_367] {strides = array<i32: 4, 1>} : memref<16x4xf32, #tpu.memory_space<vmem>>, vector<4x4xf32>
    %c0_368 = arith.constant 0 : index
    %c3_369 = arith.constant 3 : index
    %c1_370 = arith.constant 1 : index
    %c2_371 = arith.constant 2 : index
    %c0_372 = arith.constant 0 : index
    %c0_373 = arith.constant 0 : index
    %199 = vector.load %arg4[%c0_368, %c3_369, %c1_370, %c2_371, %c0_372, %c0_373] : memref<1x4x4x4x4x4xf32, #tpu.memory_space<vmem>>, vector<1x1x1x1x4x4xf32>
    %200 = vector.shape_cast %199 : vector<1x1x1x1x4x4xf32> to vector<4x4xf32>
    %201 = vector.shape_cast %198 : vector<4x4xf32> to vector<1x1x1x1x4x4xf32>
    tpu.vector_store %arg4[%c0_368, %c3_369, %c1_370, %c2_371, %c0_372, %c0_373], %201 {strides = array<i32>} : memref<1x4x4x4x4x4xf32, #tpu.memory_space<vmem>>, vector<1x1x1x1x4x4xf32>,
    %c2_374 = arith.constant 2 : index
    %c0_375 = arith.constant 0 : index
    %202 = tpu.strided_load %arg5[%c2_374, %c0_375] {strides = array<i32: 4, 1>} : memref<16x16xf32, #tpu.memory_space<vmem>>, vector<4x16xf32>
    %203 = tpu.transpose %202, [1, 0] : vector<4x16xf32> -> vector<16x4xf32>
    %c0_376 = arith.constant 0 : index
    %c0_377 = arith.constant 0 : index
    %204 = vector.load %arg9[%c0_376, %c0_377] : memref<16x4xf32, #tpu.memory_space<vmem>>, vector<16x4xf32>
    tpu.vector_store %arg9[%c0_376, %c0_377], %203 {strides = array<i32>} : memref<16x4xf32, #tpu.memory_space<vmem>>, vector<16x4xf32>,
    %c0_378 = arith.constant 0 : index
    %c0_379 = arith.constant 0 : index
    %205 = tpu.strided_load %arg9[%c0_378, %c0_379] {strides = array<i32: 4, 1>} : memref<16x4xf32, #tpu.memory_space<vmem>>, vector<4x4xf32>
    %c0_380 = arith.constant 0 : index
    %c0_381 = arith.constant 0 : index
    %c2_382 = arith.constant 2 : index
    %c2_383 = arith.constant 2 : index
    %c0_384 = arith.constant 0 : index
    %c0_385 = arith.constant 0 : index
    %206 = vector.load %arg4[%c0_380, %c0_381, %c2_382, %c2_383, %c0_384, %c0_385] : memref<1x4x4x4x4x4xf32, #tpu.memory_space<vmem>>, vector<1x1x1x1x4x4xf32>
    %207 = vector.shape_cast %206 : vector<1x1x1x1x4x4xf32> to vector<4x4xf32>
    %208 = vector.shape_cast %205 : vector<4x4xf32> to vector<1x1x1x1x4x4xf32>
    tpu.vector_store %arg4[%c0_380, %c0_381, %c2_382, %c2_383, %c0_384, %c0_385], %208 {strides = array<i32>} : memref<1x4x4x4x4x4xf32, #tpu.memory_space<vmem>>, vector<1x1x1x1x4x4xf32>,
    %c1_386 = arith.constant 1 : index
    %c0_387 = arith.constant 0 : index
    %209 = tpu.strided_load %arg9[%c1_386, %c0_387] {strides = array<i32: 4, 1>} : memref<16x4xf32, #tpu.memory_space<vmem>>, vector<4x4xf32>
    %c0_388 = arith.constant 0 : index
    %c1_389 = arith.constant 1 : index
    %c2_390 = arith.constant 2 : index
    %c2_391 = arith.constant 2 : index
    %c0_392 = arith.constant 0 : index
    %c0_393 = arith.constant 0 : index
    %210 = vector.load %arg4[%c0_388, %c1_389, %c2_390, %c2_391, %c0_392, %c0_393] : memref<1x4x4x4x4x4xf32, #tpu.memory_space<vmem>>, vector<1x1x1x1x4x4xf32>
    %211 = vector.shape_cast %210 : vector<1x1x1x1x4x4xf32> to vector<4x4xf32>
    %212 = vector.shape_cast %209 : vector<4x4xf32> to vector<1x1x1x1x4x4xf32>
    tpu.vector_store %arg4[%c0_388, %c1_389, %c2_390, %c2_391, %c0_392, %c0_393], %212 {strides = array<i32>} : memref<1x4x4x4x4x4xf32, #tpu.memory_space<vmem>>, vector<1x1x1x1x4x4xf32>,
    %c2_394 = arith.constant 2 : index
    %c0_395 = arith.constant 0 : index
    %213 = tpu.strided_load %arg9[%c2_394, %c0_395] {strides = array<i32: 4, 1>} : memref<16x4xf32, #tpu.memory_space<vmem>>, vector<4x4xf32>
    %c0_396 = arith.constant 0 : index
    %c2_397 = arith.constant 2 : index
    %c2_398 = arith.constant 2 : index
    %c2_399 = arith.constant 2 : index
    %c0_400 = arith.constant 0 : index
    %c0_401 = arith.constant 0 : index
    %214 = vector.load %arg4[%c0_396, %c2_397, %c2_398, %c2_399, %c0_400, %c0_401] : memref<1x4x4x4x4x4xf32, #tpu.memory_space<vmem>>, vector<1x1x1x1x4x4xf32>
    %215 = vector.shape_cast %214 : vector<1x1x1x1x4x4xf32> to vector<4x4xf32>
    %216 = vector.shape_cast %213 : vector<4x4xf32> to vector<1x1x1x1x4x4xf32>
    tpu.vector_store %arg4[%c0_396, %c2_397, %c2_398, %c2_399, %c0_400, %c0_401], %216 {strides = array<i32>} : memref<1x4x4x4x4x4xf32, #tpu.memory_space<vmem>>, vector<1x1x1x1x4x4xf32>,
    %c3_402 = arith.constant 3 : index
    %c0_403 = arith.constant 0 : index
    %217 = tpu.strided_load %arg9[%c3_402, %c0_403] {strides = array<i32: 4, 1>} : memref<16x4xf32, #tpu.memory_space<vmem>>, vector<4x4xf32>
    %c0_404 = arith.constant 0 : index
    %c3_405 = arith.constant 3 : index
    %c2_406 = arith.constant 2 : index
    %c2_407 = arith.constant 2 : index
    %c0_408 = arith.constant 0 : index
    %c0_409 = arith.constant 0 : index
    %218 = vector.load %arg4[%c0_404, %c3_405, %c2_406, %c2_407, %c0_408, %c0_409] : memref<1x4x4x4x4x4xf32, #tpu.memory_space<vmem>>, vector<1x1x1x1x4x4xf32>
    %219 = vector.shape_cast %218 : vector<1x1x1x1x4x4xf32> to vector<4x4xf32>
    %220 = vector.shape_cast %217 : vector<4x4xf32> to vector<1x1x1x1x4x4xf32>
    tpu.vector_store %arg4[%c0_404, %c3_405, %c2_406, %c2_407, %c0_408, %c0_409], %220 {strides = array<i32>} : memref<1x4x4x4x4x4xf32, #tpu.memory_space<vmem>>, vector<1x1x1x1x4x4xf32>,
    %c3_410 = arith.constant 3 : index
    %c0_411 = arith.constant 0 : index
    %221 = tpu.strided_load %arg5[%c3_410, %c0_411] {strides = array<i32: 4, 1>} : memref<16x16xf32, #tpu.memory_space<vmem>>, vector<4x16xf32>
    %222 = tpu.transpose %221, [1, 0] : vector<4x16xf32> -> vector<16x4xf32>
    %c0_412 = arith.constant 0 : index
    %c0_413 = arith.constant 0 : index
    %223 = vector.load %arg10[%c0_412, %c0_413] : memref<16x4xf32, #tpu.memory_space<vmem>>, vector<16x4xf32>
    tpu.vector_store %arg10[%c0_412, %c0_413], %222 {strides = array<i32>} : memref<16x4xf32, #tpu.memory_space<vmem>>, vector<16x4xf32>,
    %c0_414 = arith.constant 0 : index
    %c0_415 = arith.constant 0 : index
    %224 = tpu.strided_load %arg10[%c0_414, %c0_415] {strides = array<i32: 4, 1>} : memref<16x4xf32, #tpu.memory_space<vmem>>, vector<4x4xf32>
    %c0_416 = arith.constant 0 : index
    %c0_417 = arith.constant 0 : index
    %c3_418 = arith.constant 3 : index
    %c2_419 = arith.constant 2 : index
    %c0_420 = arith.constant 0 : index
    %c0_421 = arith.constant 0 : index
    %225 = vector.load %arg4[%c0_416, %c0_417, %c3_418, %c2_419, %c0_420, %c0_421] : memref<1x4x4x4x4x4xf32, #tpu.memory_space<vmem>>, vector<1x1x1x1x4x4xf32>
    %226 = vector.shape_cast %225 : vector<1x1x1x1x4x4xf32> to vector<4x4xf32>
    %227 = vector.shape_cast %224 : vector<4x4xf32> to vector<1x1x1x1x4x4xf32>
    tpu.vector_store %arg4[%c0_416, %c0_417, %c3_418, %c2_419, %c0_420, %c0_421], %227 {strides = array<i32>} : memref<1x4x4x4x4x4xf32, #tpu.memory_space<vmem>>, vector<1x1x1x1x4x4xf32>,
    %c1_422 = arith.constant 1 : index
    %c0_423 = arith.constant 0 : index
    %228 = tpu.strided_load %arg10[%c1_422, %c0_423] {strides = array<i32: 4, 1>} : memref<16x4xf32, #tpu.memory_space<vmem>>, vector<4x4xf32>
    %c0_424 = arith.constant 0 : index
    %c1_425 = arith.constant 1 : index
    %c3_426 = arith.constant 3 : index
    %c2_427 = arith.constant 2 : index
    %c0_428 = arith.constant 0 : index
    %c0_429 = arith.constant 0 : index
    %229 = vector.load %arg4[%c0_424, %c1_425, %c3_426, %c2_427, %c0_428, %c0_429] : memref<1x4x4x4x4x4xf32, #tpu.memory_space<vmem>>, vector<1x1x1x1x4x4xf32>
    %230 = vector.shape_cast %229 : vector<1x1x1x1x4x4xf32> to vector<4x4xf32>
    %231 = vector.shape_cast %228 : vector<4x4xf32> to vector<1x1x1x1x4x4xf32>
    tpu.vector_store %arg4[%c0_424, %c1_425, %c3_426, %c2_427, %c0_428, %c0_429], %231 {strides = array<i32>} : memref<1x4x4x4x4x4xf32, #tpu.memory_space<vmem>>, vector<1x1x1x1x4x4xf32>,
    %c2_430 = arith.constant 2 : index
    %c0_431 = arith.constant 0 : index
    %232 = tpu.strided_load %arg10[%c2_430, %c0_431] {strides = array<i32: 4, 1>} : memref<16x4xf32, #tpu.memory_space<vmem>>, vector<4x4xf32>
    %c0_432 = arith.constant 0 : index
    %c2_433 = arith.constant 2 : index
    %c3_434 = arith.constant 3 : index
    %c2_435 = arith.constant 2 : index
    %c0_436 = arith.constant 0 : index
    %c0_437 = arith.constant 0 : index
    %233 = vector.load %arg4[%c0_432, %c2_433, %c3_434, %c2_435, %c0_436, %c0_437] : memref<1x4x4x4x4x4xf32, #tpu.memory_space<vmem>>, vector<1x1x1x1x4x4xf32>
    %234 = vector.shape_cast %233 : vector<1x1x1x1x4x4xf32> to vector<4x4xf32>
    %235 = vector.shape_cast %232 : vector<4x4xf32> to vector<1x1x1x1x4x4xf32>
    tpu.vector_store %arg4[%c0_432, %c2_433, %c3_434, %c2_435, %c0_436, %c0_437], %235 {strides = array<i32>} : memref<1x4x4x4x4x4xf32, #tpu.memory_space<vmem>>, vector<1x1x1x1x4x4xf32>,
    %c3_438 = arith.constant 3 : index
    %c0_439 = arith.constant 0 : index
    %236 = tpu.strided_load %arg10[%c3_438, %c0_439] {strides = array<i32: 4, 1>} : memref<16x4xf32, #tpu.memory_space<vmem>>, vector<4x4xf32>
    %c0_440 = arith.constant 0 : index
    %c3_441 = arith.constant 3 : index
    %c3_442 = arith.constant 3 : index
    %c2_443 = arith.constant 2 : index
    %c0_444 = arith.constant 0 : index
    %c0_445 = arith.constant 0 : index
    %237 = vector.load %arg4[%c0_440, %c3_441, %c3_442, %c2_443, %c0_444, %c0_445] : memref<1x4x4x4x4x4xf32, #tpu.memory_space<vmem>>, vector<1x1x1x1x4x4xf32>
    %238 = vector.shape_cast %237 : vector<1x1x1x1x4x4xf32> to vector<4x4xf32>
    %239 = vector.shape_cast %236 : vector<4x4xf32> to vector<1x1x1x1x4x4xf32>
    tpu.vector_store %arg4[%c0_440, %c3_441, %c3_442, %c2_443, %c0_444, %c0_445], %239 {strides = array<i32>} : memref<1x4x4x4x4x4xf32, #tpu.memory_space<vmem>>, vector<1x1x1x1x4x4xf32>,
    %c0_446 = arith.constant 0 : index
    %c3_447 = arith.constant 3 : index
    %c0_448 = arith.constant 0 : index
    %c0_449 = arith.constant 0 : index
    %240 = vector.load %arg3[%c0_446, %c3_447, %c0_448, %c0_449] : memref<1x4x16x16xf32, #tpu.memory_space<vmem>>, vector<1x1x16x16xf32>
    %241 = vector.shape_cast %240 : vector<1x1x16x16xf32> to vector<16x16xf32>
    %242 = tpu.transpose %241, [1, 0] : vector<16x16xf32> -> vector<16x16xf32>
    %c0_450 = arith.constant 0 : index
    %c0_451 = arith.constant 0 : index
    %243 = vector.load %arg6[%c0_450, %c0_451] : memref<16x16xf32, #tpu.memory_space<vmem>>, vector<16x16xf32>
    tpu.vector_store %arg6[%c0_450, %c0_451], %242 {strides = array<i32>} : memref<16x16xf32, #tpu.memory_space<vmem>>, vector<16x16xf32>,
    %c0_452 = arith.constant 0 : index
    %c0_453 = arith.constant 0 : index
    %244 = tpu.strided_load %arg6[%c0_452, %c0_453] {strides = array<i32: 4, 1>} : memref<16x16xf32, #tpu.memory_space<vmem>>, vector<4x16xf32>
    %245 = tpu.transpose %244, [1, 0] : vector<4x16xf32> -> vector<16x4xf32>
    %c0_454 = arith.constant 0 : index
    %c0_455 = arith.constant 0 : index
    %246 = vector.load %arg7[%c0_454, %c0_455] : memref<16x4xf32, #tpu.memory_space<vmem>>, vector<16x4xf32>
    tpu.vector_store %arg7[%c0_454, %c0_455], %245 {strides = array<i32>} : memref<16x4xf32, #tpu.memory_space<vmem>>, vector<16x4xf32>,
    %c0_456 = arith.constant 0 : index
    %c0_457 = arith.constant 0 : index
    %247 = tpu.strided_load %arg7[%c0_456, %c0_457] {strides = array<i32: 4, 1>} : memref<16x4xf32, #tpu.memory_space<vmem>>, vector<4x4xf32>
    %c0_458 = arith.constant 0 : index
    %c0_459 = arith.constant 0 : index
    %c0_460 = arith.constant 0 : index
    %c3_461 = arith.constant 3 : index
    %c0_462 = arith.constant 0 : index
    %c0_463 = arith.constant 0 : index
    %248 = vector.load %arg4[%c0_458, %c0_459, %c0_460, %c3_461, %c0_462, %c0_463] : memref<1x4x4x4x4x4xf32, #tpu.memory_space<vmem>>, vector<1x1x1x1x4x4xf32>
    %249 = vector.shape_cast %248 : vector<1x1x1x1x4x4xf32> to vector<4x4xf32>
    %250 = vector.shape_cast %247 : vector<4x4xf32> to vector<1x1x1x1x4x4xf32>
    tpu.vector_store %arg4[%c0_458, %c0_459, %c0_460, %c3_461, %c0_462, %c0_463], %250 {strides = array<i32>} : memref<1x4x4x4x4x4xf32, #tpu.memory_space<vmem>>, vector<1x1x1x1x4x4xf32>,
    %c1_464 = arith.constant 1 : index
    %c0_465 = arith.constant 0 : index
    %251 = tpu.strided_load %arg7[%c1_464, %c0_465] {strides = array<i32: 4, 1>} : memref<16x4xf32, #tpu.memory_space<vmem>>, vector<4x4xf32>
    %c0_466 = arith.constant 0 : index
    %c1_467 = arith.constant 1 : index
    %c0_468 = arith.constant 0 : index
    %c3_469 = arith.constant 3 : index
    %c0_470 = arith.constant 0 : index
    %c0_471 = arith.constant 0 : index
    %252 = vector.load %arg4[%c0_466, %c1_467, %c0_468, %c3_469, %c0_470, %c0_471] : memref<1x4x4x4x4x4xf32, #tpu.memory_space<vmem>>, vector<1x1x1x1x4x4xf32>
    %253 = vector.shape_cast %252 : vector<1x1x1x1x4x4xf32> to vector<4x4xf32>
    %254 = vector.shape_cast %251 : vector<4x4xf32> to vector<1x1x1x1x4x4xf32>
    tpu.vector_store %arg4[%c0_466, %c1_467, %c0_468, %c3_469, %c0_470, %c0_471], %254 {strides = array<i32>} : memref<1x4x4x4x4x4xf32, #tpu.memory_space<vmem>>, vector<1x1x1x1x4x4xf32>,
    %c2_472 = arith.constant 2 : index
    %c0_473 = arith.constant 0 : index
    %255 = tpu.strided_load %arg7[%c2_472, %c0_473] {strides = array<i32: 4, 1>} : memref<16x4xf32, #tpu.memory_space<vmem>>, vector<4x4xf32>
    %c0_474 = arith.constant 0 : index
    %c2_475 = arith.constant 2 : index
    %c0_476 = arith.constant 0 : index
    %c3_477 = arith.constant 3 : index
    %c0_478 = arith.constant 0 : index
    %c0_479 = arith.constant 0 : index
    %256 = vector.load %arg4[%c0_474, %c2_475, %c0_476, %c3_477, %c0_478, %c0_479] : memref<1x4x4x4x4x4xf32, #tpu.memory_space<vmem>>, vector<1x1x1x1x4x4xf32>
    %257 = vector.shape_cast %256 : vector<1x1x1x1x4x4xf32> to vector<4x4xf32>
    %258 = vector.shape_cast %255 : vector<4x4xf32> to vector<1x1x1x1x4x4xf32>
    tpu.vector_store %arg4[%c0_474, %c2_475, %c0_476, %c3_477, %c0_478, %c0_479], %258 {strides = array<i32>} : memref<1x4x4x4x4x4xf32, #tpu.memory_space<vmem>>, vector<1x1x1x1x4x4xf32>,
    %c3_480 = arith.constant 3 : index
    %c0_481 = arith.constant 0 : index
    %259 = tpu.strided_load %arg7[%c3_480, %c0_481] {strides = array<i32: 4, 1>} : memref<16x4xf32, #tpu.memory_space<vmem>>, vector<4x4xf32>
    %c0_482 = arith.constant 0 : index
    %c3_483 = arith.constant 3 : index
    %c0_484 = arith.constant 0 : index
    %c3_485 = arith.constant 3 : index
    %c0_486 = arith.constant 0 : index
    %c0_487 = arith.constant 0 : index
    %260 = vector.load %arg4[%c0_482, %c3_483, %c0_484, %c3_485, %c0_486, %c0_487] : memref<1x4x4x4x4x4xf32, #tpu.memory_space<vmem>>, vector<1x1x1x1x4x4xf32>
    %261 = vector.shape_cast %260 : vector<1x1x1x1x4x4xf32> to vector<4x4xf32>
    %262 = vector.shape_cast %259 : vector<4x4xf32> to vector<1x1x1x1x4x4xf32>
    tpu.vector_store %arg4[%c0_482, %c3_483, %c0_484, %c3_485, %c0_486, %c0_487], %262 {strides = array<i32>} : memref<1x4x4x4x4x4xf32, #tpu.memory_space<vmem>>, vector<1x1x1x1x4x4xf32>,
    %c1_488 = arith.constant 1 : index
    %c0_489 = arith.constant 0 : index
    %263 = tpu.strided_load %arg6[%c1_488, %c0_489] {strides = array<i32: 4, 1>} : memref<16x16xf32, #tpu.memory_space<vmem>>, vector<4x16xf32>
    %264 = tpu.transpose %263, [1, 0] : vector<4x16xf32> -> vector<16x4xf32>
    %c0_490 = arith.constant 0 : index
    %c0_491 = arith.constant 0 : index
    %265 = vector.load %arg8[%c0_490, %c0_491] : memref<16x4xf32, #tpu.memory_space<vmem>>, vector<16x4xf32>
    tpu.vector_store %arg8[%c0_490, %c0_491], %264 {strides = array<i32>} : memref<16x4xf32, #tpu.memory_space<vmem>>, vector<16x4xf32>,
    %c0_492 = arith.constant 0 : index
    %c0_493 = arith.constant 0 : index
    %266 = tpu.strided_load %arg8[%c0_492, %c0_493] {strides = array<i32: 4, 1>} : memref<16x4xf32, #tpu.memory_space<vmem>>, vector<4x4xf32>
    %c0_494 = arith.constant 0 : index
    %c0_495 = arith.constant 0 : index
    %c1_496 = arith.constant 1 : index
    %c3_497 = arith.constant 3 : index
    %c0_498 = arith.constant 0 : index
    %c0_499 = arith.constant 0 : index
    %267 = vector.load %arg4[%c0_494, %c0_495, %c1_496, %c3_497, %c0_498, %c0_499] : memref<1x4x4x4x4x4xf32, #tpu.memory_space<vmem>>, vector<1x1x1x1x4x4xf32>
    %268 = vector.shape_cast %267 : vector<1x1x1x1x4x4xf32> to vector<4x4xf32>
    %269 = vector.shape_cast %266 : vector<4x4xf32> to vector<1x1x1x1x4x4xf32>
    tpu.vector_store %arg4[%c0_494, %c0_495, %c1_496, %c3_497, %c0_498, %c0_499], %269 {strides = array<i32>} : memref<1x4x4x4x4x4xf32, #tpu.memory_space<vmem>>, vector<1x1x1x1x4x4xf32>,
    %c1_500 = arith.constant 1 : index
    %c0_501 = arith.constant 0 : index
    %270 = tpu.strided_load %arg8[%c1_500, %c0_501] {strides = array<i32: 4, 1>} : memref<16x4xf32, #tpu.memory_space<vmem>>, vector<4x4xf32>
    %c0_502 = arith.constant 0 : index
    %c1_503 = arith.constant 1 : index
    %c1_504 = arith.constant 1 : index
    %c3_505 = arith.constant 3 : index
    %c0_506 = arith.constant 0 : index
    %c0_507 = arith.constant 0 : index
    %271 = vector.load %arg4[%c0_502, %c1_503, %c1_504, %c3_505, %c0_506, %c0_507] : memref<1x4x4x4x4x4xf32, #tpu.memory_space<vmem>>, vector<1x1x1x1x4x4xf32>
    %272 = vector.shape_cast %271 : vector<1x1x1x1x4x4xf32> to vector<4x4xf32>
    %273 = vector.shape_cast %270 : vector<4x4xf32> to vector<1x1x1x1x4x4xf32>
    tpu.vector_store %arg4[%c0_502, %c1_503, %c1_504, %c3_505, %c0_506, %c0_507], %273 {strides = array<i32>} : memref<1x4x4x4x4x4xf32, #tpu.memory_space<vmem>>, vector<1x1x1x1x4x4xf32>,
    %c2_508 = arith.constant 2 : index
    %c0_509 = arith.constant 0 : index
    %274 = tpu.strided_load %arg8[%c2_508, %c0_509] {strides = array<i32: 4, 1>} : memref<16x4xf32, #tpu.memory_space<vmem>>, vector<4x4xf32>
    %c0_510 = arith.constant 0 : index
    %c2_511 = arith.constant 2 : index
    %c1_512 = arith.constant 1 : index
    %c3_513 = arith.constant 3 : index
    %c0_514 = arith.constant 0 : index
    %c0_515 = arith.constant 0 : index
    %275 = vector.load %arg4[%c0_510, %c2_511, %c1_512, %c3_513, %c0_514, %c0_515] : memref<1x4x4x4x4x4xf32, #tpu.memory_space<vmem>>, vector<1x1x1x1x4x4xf32>
    %276 = vector.shape_cast %275 : vector<1x1x1x1x4x4xf32> to vector<4x4xf32>
    %277 = vector.shape_cast %274 : vector<4x4xf32> to vector<1x1x1x1x4x4xf32>
    tpu.vector_store %arg4[%c0_510, %c2_511, %c1_512, %c3_513, %c0_514, %c0_515], %277 {strides = array<i32>} : memref<1x4x4x4x4x4xf32, #tpu.memory_space<vmem>>, vector<1x1x1x1x4x4xf32>,
    %c3_516 = arith.constant 3 : index
    %c0_517 = arith.constant 0 : index
    %278 = tpu.strided_load %arg8[%c3_516, %c0_517] {strides = array<i32: 4, 1>} : memref<16x4xf32, #tpu.memory_space<vmem>>, vector<4x4xf32>
    %c0_518 = arith.constant 0 : index
    %c3_519 = arith.constant 3 : index
    %c1_520 = arith.constant 1 : index
    %c3_521 = arith.constant 3 : index
    %c0_522 = arith.constant 0 : index
    %c0_523 = arith.constant 0 : index
    %279 = vector.load %arg4[%c0_518, %c3_519, %c1_520, %c3_521, %c0_522, %c0_523] : memref<1x4x4x4x4x4xf32, #tpu.memory_space<vmem>>, vector<1x1x1x1x4x4xf32>
    %280 = vector.shape_cast %279 : vector<1x1x1x1x4x4xf32> to vector<4x4xf32>
    %281 = vector.shape_cast %278 : vector<4x4xf32> to vector<1x1x1x1x4x4xf32>
    tpu.vector_store %arg4[%c0_518, %c3_519, %c1_520, %c3_521, %c0_522, %c0_523], %281 {strides = array<i32>} : memref<1x4x4x4x4x4xf32, #tpu.memory_space<vmem>>, vector<1x1x1x1x4x4xf32>,
    %c2_524 = arith.constant 2 : index
    %c0_525 = arith.constant 0 : index
    %282 = tpu.strided_load %arg6[%c2_524, %c0_525] {strides = array<i32: 4, 1>} : memref<16x16xf32, #tpu.memory_space<vmem>>, vector<4x16xf32>
    %283 = tpu.transpose %282, [1, 0] : vector<4x16xf32> -> vector<16x4xf32>
    %c0_526 = arith.constant 0 : index
    %c0_527 = arith.constant 0 : index
    %284 = vector.load %arg9[%c0_526, %c0_527] : memref<16x4xf32, #tpu.memory_space<vmem>>, vector<16x4xf32>
    tpu.vector_store %arg9[%c0_526, %c0_527], %283 {strides = array<i32>} : memref<16x4xf32, #tpu.memory_space<vmem>>, vector<16x4xf32>,
    %c0_528 = arith.constant 0 : index
    %c0_529 = arith.constant 0 : index
    %285 = tpu.strided_load %arg9[%c0_528, %c0_529] {strides = array<i32: 4, 1>} : memref<16x4xf32, #tpu.memory_space<vmem>>, vector<4x4xf32>
    %c0_530 = arith.constant 0 : index
    %c0_531 = arith.constant 0 : index
    %c2_532 = arith.constant 2 : index
    %c3_533 = arith.constant 3 : index
    %c0_534 = arith.constant 0 : index
    %c0_535 = arith.constant 0 : index
    %286 = vector.load %arg4[%c0_530, %c0_531, %c2_532, %c3_533, %c0_534, %c0_535] : memref<1x4x4x4x4x4xf32, #tpu.memory_space<vmem>>, vector<1x1x1x1x4x4xf32>
    %287 = vector.shape_cast %286 : vector<1x1x1x1x4x4xf32> to vector<4x4xf32>
    %288 = vector.shape_cast %285 : vector<4x4xf32> to vector<1x1x1x1x4x4xf32>
    tpu.vector_store %arg4[%c0_530, %c0_531, %c2_532, %c3_533, %c0_534, %c0_535], %288 {strides = array<i32>} : memref<1x4x4x4x4x4xf32, #tpu.memory_space<vmem>>, vector<1x1x1x1x4x4xf32>,
    %c1_536 = arith.constant 1 : index
    %c0_537 = arith.constant 0 : index
    %289 = tpu.strided_load %arg9[%c1_536, %c0_537] {strides = array<i32: 4, 1>} : memref<16x4xf32, #tpu.memory_space<vmem>>, vector<4x4xf32>
    %c0_538 = arith.constant 0 : index
    %c1_539 = arith.constant 1 : index
    %c2_540 = arith.constant 2 : index
    %c3_541 = arith.constant 3 : index
    %c0_542 = arith.constant 0 : index
    %c0_543 = arith.constant 0 : index
    %290 = vector.load %arg4[%c0_538, %c1_539, %c2_540, %c3_541, %c0_542, %c0_543] : memref<1x4x4x4x4x4xf32, #tpu.memory_space<vmem>>, vector<1x1x1x1x4x4xf32>
    %291 = vector.shape_cast %290 : vector<1x1x1x1x4x4xf32> to vector<4x4xf32>
    %292 = vector.shape_cast %289 : vector<4x4xf32> to vector<1x1x1x1x4x4xf32>
    tpu.vector_store %arg4[%c0_538, %c1_539, %c2_540, %c3_541, %c0_542, %c0_543], %292 {strides = array<i32>} : memref<1x4x4x4x4x4xf32, #tpu.memory_space<vmem>>, vector<1x1x1x1x4x4xf32>,
    %c2_544 = arith.constant 2 : index
    %c0_545 = arith.constant 0 : index
    %293 = tpu.strided_load %arg9[%c2_544, %c0_545] {strides = array<i32: 4, 1>} : memref<16x4xf32, #tpu.memory_space<vmem>>, vector<4x4xf32>
    %c0_546 = arith.constant 0 : index
    %c2_547 = arith.constant 2 : index
    %c2_548 = arith.constant 2 : index
    %c3_549 = arith.constant 3 : index
    %c0_550 = arith.constant 0 : index
    %c0_551 = arith.constant 0 : index
    %294 = vector.load %arg4[%c0_546, %c2_547, %c2_548, %c3_549, %c0_550, %c0_551] : memref<1x4x4x4x4x4xf32, #tpu.memory_space<vmem>>, vector<1x1x1x1x4x4xf32>
    %295 = vector.shape_cast %294 : vector<1x1x1x1x4x4xf32> to vector<4x4xf32>
    %296 = vector.shape_cast %293 : vector<4x4xf32> to vector<1x1x1x1x4x4xf32>
    tpu.vector_store %arg4[%c0_546, %c2_547, %c2_548, %c3_549, %c0_550, %c0_551], %296 {strides = array<i32>} : memref<1x4x4x4x4x4xf32, #tpu.memory_space<vmem>>, vector<1x1x1x1x4x4xf32>,
    %c3_552 = arith.constant 3 : index
    %c0_553 = arith.constant 0 : index
    %297 = tpu.strided_load %arg9[%c3_552, %c0_553] {strides = array<i32: 4, 1>} : memref<16x4xf32, #tpu.memory_space<vmem>>, vector<4x4xf32>
    %c0_554 = arith.constant 0 : index
    %c3_555 = arith.constant 3 : index
    %c2_556 = arith.constant 2 : index
    %c3_557 = arith.constant 3 : index
    %c0_558 = arith.constant 0 : index
    %c0_559 = arith.constant 0 : index
    %298 = vector.load %arg4[%c0_554, %c3_555, %c2_556, %c3_557, %c0_558, %c0_559] : memref<1x4x4x4x4x4xf32, #tpu.memory_space<vmem>>, vector<1x1x1x1x4x4xf32>
    %299 = vector.shape_cast %298 : vector<1x1x1x1x4x4xf32> to vector<4x4xf32>
    %300 = vector.shape_cast %297 : vector<4x4xf32> to vector<1x1x1x1x4x4xf32>
    tpu.vector_store %arg4[%c0_554, %c3_555, %c2_556, %c3_557, %c0_558, %c0_559], %300 {strides = array<i32>} : memref<1x4x4x4x4x4xf32, #tpu.memory_space<vmem>>, vector<1x1x1x1x4x4xf32>,
    %c3_560 = arith.constant 3 : index
    %c0_561 = arith.constant 0 : index
    %301 = tpu.strided_load %arg6[%c3_560, %c0_561] {strides = array<i32: 4, 1>} : memref<16x16xf32, #tpu.memory_space<vmem>>, vector<4x16xf32>
    %302 = tpu.transpose %301, [1, 0] : vector<4x16xf32> -> vector<16x4xf32>
    %c0_562 = arith.constant 0 : index
    %c0_563 = arith.constant 0 : index
    %303 = vector.load %arg10[%c0_562, %c0_563] : memref<16x4xf32, #tpu.memory_space<vmem>>, vector<16x4xf32>
    tpu.vector_store %arg10[%c0_562, %c0_563], %302 {strides = array<i32>} : memref<16x4xf32, #tpu.memory_space<vmem>>, vector<16x4xf32>,
    %c0_564 = arith.constant 0 : index
    %c0_565 = arith.constant 0 : index
    %304 = tpu.strided_load %arg10[%c0_564, %c0_565] {strides = array<i32: 4, 1>} : memref<16x4xf32, #tpu.memory_space<vmem>>, vector<4x4xf32>
    %c0_566 = arith.constant 0 : index
    %c0_567 = arith.constant 0 : index
    %c3_568 = arith.constant 3 : index
    %c3_569 = arith.constant 3 : index
    %c0_570 = arith.constant 0 : index
    %c0_571 = arith.constant 0 : index
    %305 = vector.load %arg4[%c0_566, %c0_567, %c3_568, %c3_569, %c0_570, %c0_571] : memref<1x4x4x4x4x4xf32, #tpu.memory_space<vmem>>, vector<1x1x1x1x4x4xf32>
    %306 = vector.shape_cast %305 : vector<1x1x1x1x4x4xf32> to vector<4x4xf32>
    %307 = vector.shape_cast %304 : vector<4x4xf32> to vector<1x1x1x1x4x4xf32>
    tpu.vector_store %arg4[%c0_566, %c0_567, %c3_568, %c3_569, %c0_570, %c0_571], %307 {strides = array<i32>} : memref<1x4x4x4x4x4xf32, #tpu.memory_space<vmem>>, vector<1x1x1x1x4x4xf32>,
    %c1_572 = arith.constant 1 : index
    %c0_573 = arith.constant 0 : index
    %308 = tpu.strided_load %arg10[%c1_572, %c0_573] {strides = array<i32: 4, 1>} : memref<16x4xf32, #tpu.memory_space<vmem>>, vector<4x4xf32>
    %c0_574 = arith.constant 0 : index
    %c1_575 = arith.constant 1 : index
    %c3_576 = arith.constant 3 : index
    %c3_577 = arith.constant 3 : index
    %c0_578 = arith.constant 0 : index
    %c0_579 = arith.constant 0 : index
    %309 = vector.load %arg4[%c0_574, %c1_575, %c3_576, %c3_577, %c0_578, %c0_579] : memref<1x4x4x4x4x4xf32, #tpu.memory_space<vmem>>, vector<1x1x1x1x4x4xf32>
    %310 = vector.shape_cast %309 : vector<1x1x1x1x4x4xf32> to vector<4x4xf32>
    %311 = vector.shape_cast %308 : vector<4x4xf32> to vector<1x1x1x1x4x4xf32>
    tpu.vector_store %arg4[%c0_574, %c1_575, %c3_576, %c3_577, %c0_578, %c0_579], %311 {strides = array<i32>} : memref<1x4x4x4x4x4xf32, #tpu.memory_space<vmem>>, vector<1x1x1x1x4x4xf32>,
    %c2_580 = arith.constant 2 : index
    %c0_581 = arith.constant 0 : index
    %312 = tpu.strided_load %arg10[%c2_580, %c0_581] {strides = array<i32: 4, 1>} : memref<16x4xf32, #tpu.memory_space<vmem>>, vector<4x4xf32>
    %c0_582 = arith.constant 0 : index
    %c2_583 = arith.constant 2 : index
    %c3_584 = arith.constant 3 : index
    %c3_585 = arith.constant 3 : index
    %c0_586 = arith.constant 0 : index
    %c0_587 = arith.constant 0 : index
    %313 = vector.load %arg4[%c0_582, %c2_583, %c3_584, %c3_585, %c0_586, %c0_587] : memref<1x4x4x4x4x4xf32, #tpu.memory_space<vmem>>, vector<1x1x1x1x4x4xf32>
    %314 = vector.shape_cast %313 : vector<1x1x1x1x4x4xf32> to vector<4x4xf32>
    %315 = vector.shape_cast %312 : vector<4x4xf32> to vector<1x1x1x1x4x4xf32>
    tpu.vector_store %arg4[%c0_582, %c2_583, %c3_584, %c3_585, %c0_586, %c0_587], %315 {strides = array<i32>} : memref<1x4x4x4x4x4xf32, #tpu.memory_space<vmem>>, vector<1x1x1x1x4x4xf32>,
    %c3_588 = arith.constant 3 : index
    %c0_589 = arith.constant 0 : index
    %316 = tpu.strided_load %arg10[%c3_588, %c0_589] {strides = array<i32: 4, 1>} : memref<16x4xf32, #tpu.memory_space<vmem>>, vector<4x4xf32>
    %c0_590 = arith.constant 0 : index
    %c3_591 = arith.constant 3 : index
    %c3_592 = arith.constant 3 : index
    %c3_593 = arith.constant 3 : index
    %c0_594 = arith.constant 0 : index
    %c0_595 = arith.constant 0 : index
    %317 = vector.load %arg4[%c0_590, %c3_591, %c3_592, %c3_593, %c0_594, %c0_595] : memref<1x4x4x4x4x4xf32, #tpu.memory_space<vmem>>, vector<1x1x1x1x4x4xf32>
    %318 = vector.shape_cast %317 : vector<1x1x1x1x4x4xf32> to vector<4x4xf32>
    %319 = vector.shape_cast %316 : vector<4x4xf32> to vector<1x1x1x1x4x4xf32>
    tpu.vector_store %arg4[%c0_590, %c3_591, %c3_592, %c3_593, %c0_594, %c0_595], %319 {strides = array<i32>} : memref<1x4x4x4x4x4xf32, #tpu.memory_space<vmem>>, vector<1x1x1x1x4x4xf32>,
    return
  }
  func.func @transform_0(%arg0: i32, %arg1: i32, %arg2: i32) -> (i32, i32, i32, i32) {
    %c0_i32 = arith.constant 0 : i32
    %c0_i32_0 = arith.constant 0 : i32
    return %arg0, %arg1, %arg2, %c0_i32 : i32, i32, i32, i32
  }
  func.func @transform_1(%arg0: i32, %arg1: i32, %arg2: i32) -> (i32, i32, i32, i32, i32, i32) {
    %c0_i32 = arith.constant 0 : i32
    %c0_i32_0 = arith.constant 0 : i32
    %c0_i32_1 = arith.constant 0 : i32
    %c0_i32_2 = arith.constant 0 : i32
    return %arg0, %c0_i32, %c0_i32_0, %arg1, %arg2, %c0_i32_1 : i32, i32, i32, i32, i32, i32
  }
}

</mosaic_0001>

<llo_original>
// kernel: space_to_depth.1
$region0: #{space_to_depth.1}
  #allocation0 [shape = 'u32[]', space=smem, size = 0x4, offset = 0x4, fixed_abs, tag = 'smem constant byte address 0x4 - core index']
  #allocation1 [shape = 'u32[144,128]{1,0:T(1,128)}', space=vmem, size = 0x12000, scoped, tag = 'internal scratch']
  #allocation2 [shape = 'f32[16,16]{1,0:T(8,128)}', space=vmem, size = 0x2000, scoped, tag = 'scratch operand']
  #allocation3 [shape = 'f32[16,16]{1,0:T(8,128)}', space=vmem, size = 0x2000, scoped, tag = 'scratch operand']
  #allocation4 [shape = 'f32[16,4]{1,0:T(8,128)}', space=vmem, size = 0x2000, scoped, tag = 'scratch operand']
  #allocation5 [shape = 'f32[16,4]{1,0:T(8,128)}', space=vmem, size = 0x2000, scoped, tag = 'scratch operand']
  #allocation6 [shape = 'f32[16,4]{1,0:T(8,128)}', space=vmem, size = 0x2000, scoped, tag = 'scratch operand']
  #allocation7 [shape = 'f32[16,4]{1,0:T(8,128)}', space=vmem, size = 0x2000, scoped, tag = 'scratch operand']
  %s0 = inlined_call_operand.hbm [shape: f32[2,4,16,16], index: 0, kind: input, shape index: {}]
  %s1 = inlined_call_operand.vmem [shape: f32[2,4,4,4,4,4], index: 1, kind: output, shape index: {}]
  %s2 = sld [smem:[#allocation0]]
  $region41: #{space_to_depth.1} parent=0
    _
  %s4 = ssub.s32 1, %s2
  %s5 = scalar_select 0, %s4, %s2
  $region1: #{space_to_depth.1} parent=0
    #allocation8 [shape = 'u8[65536]{0}', space=vmem, size = 0x10000, scoped, tag = 'input window, operand 0']
    #allocation9 [shape = 's32[2]{0}', space=sflag, size = 0x8, scoped, tag = 'scoped memory for space_to_depth.1']
    %6 = vsyncpa [#allocation9], 0
    %s7 = scalar_lea.sflag [#allocation9], 1
    %8 = vsyncpa %s7, 0
    loop: start=0, step=1, limit=4
    $region2: #{space_to_depth.1} parent=1 // loop_pre_header
      _
    $region3: #{space_to_depth.1} parent=1 // loop_header
      %s10 = sphi 0, %s14
      %p11 = scmp.ge.s32.totalorder %s10, 4
      %s17 = sphi 0, %s36
      %s18 = sphi 0, %s32
      %s19 = sphi 0, %s28
      %s20 = sphi 0, %s17
      %s21 = sphi 0, %s18
      %s22 = sphi 0, %s19
      %s23 = sphi 0, %s20
      %s24 = sphi 0, %s21
      %s25 = sphi 0, %s22
      %s43 = sphi 0, %s45
      %s46 = sphi 0, %s43
      %s47 = sphi 0, %s46
      %s63 = sphi 0, %s47
      %s73 = sphi 0, %s75
      %s76 = sphi 0, %s73
      %s77 = sphi 0, %s76
      %s93 = sphi 0, %s77
    $region4: #{space_to_depth.1} parent=1 // loop_header_branch
      %13 = sbr.rel (%p11) target = $region8
    $region5: #{space_to_depth.1} parent=1 // loop_body
      %s15 = ssub.s32 %s10, 1
      %s16 = ssub.s32 %s10, 2
      %s26 = sadd.s32 1, %s19
      %p27 = scmp.ge.s32.totalorder %s26, 1
      %s28 = scalar_select %p27, 0, %s26
      %s29 = sadd.s32 1, %s18
      %s30 = scalar_select %p27, %s29, %s18
      %p31 = scmp.ge.s32.totalorder %s30, 1
      %s32 = scalar_select %p31, 0, %s30
      %s33 = sadd.s32 1, %s17
      %s34 = scalar_select %p31, %s33, %s17
      %p35 = scmp.ge.s32.totalorder %s34, 2
      %s36 = scalar_select %p35, 0, %s34
      %s37 = ssub.s32 %s17, %s36
      %s38 = ssub.s32 %s18, %s32
      %s39 = sor.u32 %s37, %s38
      %s40 = ssub.s32 %s19, %s28
      %s41 = sor.u32 %s39, %s40
      %p42 = scmp.eq.s32.totalorder %s41, 0
      %s44 = sadd.s32 %s43, 1
      %s45 = scalar_select %p42, %s43, %s44
      %p48 = pneg %p42
      %p49 = scmp.eq.s32.totalorder %s10, 1
      %p50 = por %p48, %p49
      %p51 = scmp.ne.s32.totalorder %s43, %s46
      %p52 = scmp.eq.s32.totalorder %s10, 0
      %p53 = por %p51, %p52
      %p54 = scmp.ne.s32.totalorder %s43, %s46
      %p55 = scmp.eq.s32.totalorder %s15, 1
      %p56 = por %p54, %p55
      %p57 = scmp.ne.s32.totalorder %s46, %s47
      %p58 = scmp.eq.s32.totalorder %s15, 0
      %p59 = por %p57, %p58
      %p60 = scmp.ne.s32.totalorder %s46, %s47
      %p61 = scmp.eq.s32.totalorder %s16, 1
      %p62 = por %p60, %p61
      %p64 = scmp.ne.s32.totalorder %s47, %s63
      %p65 = scmp.eq.s32.totalorder %s16, 0
      %p66 = por %p64, %p65
      %s67 = ssub.s32 %s17, %s36
      %s68 = ssub.s32 %s18, %s32
      %s69 = sor.u32 %s67, %s68
      %s70 = ssub.s32 %s19, %s28
      %s71 = sor.u32 %s69, %s70
      %p72 = scmp.eq.s32.totalorder %s71, 0
      %s74 = sadd.s32 %s73, 1
      %s75 = scalar_select %p72, %s73, %s74
      %p78 = pneg %p72
      %p79 = scmp.eq.s32.totalorder %s10, 1
      %p80 = por %p78, %p79
      %p81 = scmp.ne.s32.totalorder %s73, %s76
      %p82 = scmp.eq.s32.totalorder %s10, 0
      %p83 = por %p81, %p82
      %p84 = scmp.ne.s32.totalorder %s73, %s76
      %p85 = scmp.eq.s32.totalorder %s15, 1
      %p86 = por %p84, %p85
      %p87 = scmp.ne.s32.totalorder %s76, %s77
      %p88 = scmp.eq.s32.totalorder %s15, 0
      %p89 = por %p87, %p88
      %p90 = scmp.ne.s32.totalorder %s76, %s77
      %p91 = scmp.eq.s32.totalorder %s16, 1
      %p92 = por %p90, %p91
      %p94 = scmp.ne.s32.totalorder %s77, %s93
      %p95 = scmp.eq.s32.totalorder %s16, 0
      %p96 = por %p94, %p95
      %p97 = scmp.le.s32.totalorder 1, %s10
      %p98 = scmp.lt.s32.totalorder %s10, 3
      %p99 = pnand %p97, %p98
      %p100 = pneg %p99
      // Predicated region
      $region9: #{space_to_depth.1} parent=5 // pred_check
        _
      $region10: #{space_to_depth.1} parent=5 // pred_check_branch
        %102 = sbr.rel (%p99) target = $region12
      $region11: #{space_to_depth.1} parent=5 // pred_region
        %s103 = ssub.s32 %s10, 1
      $region12: #{space_to_depth.1} parent=5 // pred_fallthru
        _
      %p104 = scmp.lt.s32.totalorder %s10, 2
      // Predicated region
      $region13: #{space_to_depth.1} parent=5 // pred_check
        %p105 = pneg %p104
      $region14: #{space_to_depth.1} parent=5 // pred_check_branch
        %107 = sbr.rel (%p105) target = $region16
      $region15: #{space_to_depth.1} parent=5 // pred_region
        // Predicated region
        $region17: #{space_to_depth.1} parent=15 // pred_check
          %p108 = pneg %p53
        $region18: #{space_to_depth.1} parent=15 // pred_check_branch
          %110 = sbr.rel (%p108) target = $region20
        $region19: #{space_to_depth.1} parent=15 // pred_region
          %s111 = sand.u32 %s43, 1
          %s112 = scalar_lea.sflag [#allocation9], %s111
          %s113 = sand.u32 %s43, 1
          %s114 = smul.addr %s113, 64
          %s115 = scalar_lea.vmem [#allocation8], %s114
          %s116 = smul.u32 4, %s18
          %s117 = smul.u32 2, %s19
          %s119 = ssub.s32 1024, 1024
          %120 = vsyncadd %s112, %s119
          %s121 = smul.addr %s116, 2
          %s122 = sadd.s32 %s117, %s121
          %s123 = smul.addr %s17, 8
          %s124 = sadd.s32 %s122, %s123
          %s125 = smul.addr %s124, 128
          %s126 = scalar_lea.hbm %s0, %s125
          %s127 = sshll.u32 %s115, 4
          %s128 = int_to_ptr.vmem [resolvable:$true] %s127
          %133 = dma.hbm_to_vmem [thread:$0]  %s126, 1024, %s128, %s112, 128, 128, 8
        $region20: #{space_to_depth.1} parent=15 // pred_fallthru
          _
      $region16: #{space_to_depth.1} parent=5 // pred_fallthru
        _
      %p134 = scmp.le.s32.totalorder 1, %s10
      %p135 = scmp.lt.s32.totalorder %s10, 3
      %p136 = pnand %p134, %p135
      %p137 = pneg %p136
      // Predicated region
      $region21: #{space_to_depth.1} parent=5 // pred_check
        _
      $region22: #{space_to_depth.1} parent=5 // pred_check_branch
        %139 = sbr.rel (%p136) target = $region24
      $region23: #{space_to_depth.1} parent=5 // pred_region
        %s140 = ssub.s32 %s10, 1
        %s141 = sand.u32 %s46, 1
        %s142 = scalar_lea.sflag [#allocation9], %s141
        %s143 = sand.u32 %s46, 1
        %s144 = smul.addr %s143, 64
        %s145 = scalar_lea.vmem [#allocation8], %s144
        // Predicated region
        $region25: #{space_to_depth.1} parent=23 // pred_check
          %p146 = pneg %p59
        $region26: #{space_to_depth.1} parent=23 // pred_check_branch
          %148 = sbr.rel (%p146) target = $region28
        $region27: #{space_to_depth.1} parent=23 // pred_region
          %149 = dma.done %s142, 1024
        $region28: #{space_to_depth.1} parent=23 // pred_fallthru
          _
        %s150 = sand.u32 %s46, 1
        %s151 = scalar_lea.sflag [#allocation9], %s150
        %s152 = sand.u32 %s46, 1
        %s153 = smul.addr %s152, 64
        %s154 = scalar_lea.vmem [#allocation8], %s153
        %p155 = pneg %p59
        %p156 = pneg %p56
        %p157 = pneg %p89
        %p158 = pneg %p86
        %s159 = smul.u32 4, %s21
        %p160 = scmp.lt.s32.totalorder %s20, 1
        %s161 = scalar_select %p160, %s20, 1
        %p162 = scmp.lt.s32.totalorder %s159, 3
        %s163 = scalar_select %p162, %s159, 3
        %p164 = scmp.lt.s32.totalorder %s22, 0
        %s165 = scalar_select %p164, %s22, 0
        %s166 = sadd.s32 %s165, %s163
        %s167 = smul.addr %s161, 64
        %s168 = sadd.s32 %s166, %s167
        %s169 = smul.addr %s168, 4
        %s170 = scalar_lea.vmem %s1, %s169
        %s171 = smul.u32 4, %s21
        %s172 = smul.u32 2, %s22
        %s173 = smul.u32 4, %s21
        %p174 = scmp.lt.s32.totalorder %s20, 1
        %s175 = scalar_select %p174, %s20, 1
        %p176 = scmp.lt.s32.totalorder %s173, 3
        %s177 = scalar_select %p176, %s173, 3
        %p178 = scmp.lt.s32.totalorder %s22, 0
        %s179 = scalar_select %p178, %s22, 0
        %s180 = sadd.s32 %s179, %s177
        %s181 = smul.addr %s175, 64
        %s182 = sadd.s32 %s180, %s181
        %s183 = smul.addr %s182, 4
        %s184 = scalar_lea.vmem %s1, %s183
        %s185 = smul.u32 4, %s21
        %v186 = vld [vmem:[%s145] sm:$0xff]
        %v187 = vld [vmem:[%s145 + $0x8] sm:$0xff]
        %188 = vxpose.xlu0.b32.start [1/16] %v186, 128
        %189 = vxpose.xlu0.b32.cont [2/16] %v187, 128
        %190 = vxpose.xlu0.b32.cont [3/16] 0.0, 128
        %191 = vxpose.xlu0.b32.cont [4/16] 0.0, 128
        %192 = vxpose.xlu0.b32.cont [5/16] 0.0, 128
        %193 = vxpose.xlu0.b32.cont [6/16] 0.0, 128
        %194 = vxpose.xlu0.b32.cont [7/16] 0.0, 128
        %195 = vxpose.xlu0.b32.cont [8/16] 0.0, 128
        %196 = vxpose.xlu0.b32.cont [9/16] 0.0, 128
        %197 = vxpose.xlu0.b32.cont [10/16] 0.0, 128
        %198 = vxpose.xlu0.b32.cont [11/16] 0.0, 128
        %199 = vxpose.xlu0.b32.cont [12/16] 0.0, 128
        %200 = vxpose.xlu0.b32.cont [13/16] 0.0, 128
        %201 = vxpose.xlu0.b32.cont [14/16] 0.0, 128
        %202 = vxpose.xlu0.b32.cont [15/16] 0.0, 128
        %203 = vxpose.xlu0.b32.end [16/16] 0.0, 128
        %v204 = vpop.trf.xlu0
        %v205 = vpop.trf.xlu0
        %v206 = vpop.trf.xlu0
        %v207 = vpop.trf.xlu0
        %v208 = vpop.trf.xlu0
        %v209 = vpop.trf.xlu0
        %v210 = vpop.trf.xlu0
        %v211 = vpop.trf.xlu0
        %v212 = vpop.trf.xlu0
        %v213 = vpop.trf.xlu0
        %v214 = vpop.trf.xlu0
        %v215 = vpop.trf.xlu0
        %v216 = vpop.trf.xlu0
        %v217 = vpop.trf.xlu0
        %v218 = vpop.trf.xlu0
        %v219 = vpop.trf.xlu0
        %vm220 = vcmask 130048
        %221 = vst.msk [vmem:[#allocation2] sm:$0xff] %vm220, %v204
        %222 = vst.msk [vmem:[#allocation2 + $0x8] sm:$0xff] %vm220, %v205
        %v223 = vld [vmem:[#allocation2] ss:$4 sm:$0xf]
        %224 = vxpose.xlu0.b32.start [1/16] %v223, 128
        %225 = vxpose.xlu0.b32.cont [2/16] 0.0, 128
        %226 = vxpose.xlu0.b32.cont [3/16] 0.0, 128
        %227 = vxpose.xlu0.b32.cont [4/16] 0.0, 128
        %228 = vxpose.xlu0.b32.cont [5/16] 0.0, 128
        %229 = vxpose.xlu0.b32.cont [6/16] 0.0, 128
        %230 = vxpose.xlu0.b32.cont [7/16] 0.0, 128
        %231 = vxpose.xlu0.b32.cont [8/16] 0.0, 128
        %232 = vxpose.xlu0.b32.cont [9/16] 0.0, 128
        %233 = vxpose.xlu0.b32.cont [10/16] 0.0, 128
        %234 = vxpose.xlu0.b32.cont [11/16] 0.0, 128
        %235 = vxpose.xlu0.b32.cont [12/16] 0.0, 128
        %236 = vxpose.xlu0.b32.cont [13/16] 0.0, 128
        %237 = vxpose.xlu0.b32.cont [14/16] 0.0, 128
        %238 = vxpose.xlu0.b32.cont [15/16] 0.0, 128
        %239 = vxpose.xlu0.b32.end [16/16] 0.0, 128
        %v240 = vpop.trf.xlu0
        %v241 = vpop.trf.xlu0
        %v242 = vpop.trf.xlu0
        %v243 = vpop.trf.xlu0
        %v244 = vpop.trf.xlu0
        %v245 = vpop.trf.xlu0
        %v246 = vpop.trf.xlu0
        %v247 = vpop.trf.xlu0
        %v248 = vpop.trf.xlu0
        %v249 = vpop.trf.xlu0
        %v250 = vpop.trf.xlu0
        %v251 = vpop.trf.xlu0
        %v252 = vpop.trf.xlu0
        %v253 = vpop.trf.xlu0
        %v254 = vpop.trf.xlu0
        %v255 = vpop.trf.xlu0
        %vm256 = vcmask 31744
        %257 = vst.msk [vmem:[#allocation4] sm:$0xff] %vm256, %v240
        %258 = vst.msk [vmem:[#allocation4 + $0x8] sm:$0xff] %vm256, %v241
        %v259 = vld [vmem:[#allocation4] ss:$4 sm:$0xf]
        %vm260 = vcmask 27648
        %261 = vst.msk [vmem:[%s184] sm:$0xf] %vm260, %v259
        %s262 = scalar_lea.vmem [#allocation4], 1
        %v263 = vld [vmem:[%s262] ss:$4 sm:$0xf]
        %s264 = scalar_lea.vmem %s184, 64
        %265 = vst.msk [vmem:[%s264] sm:$0xf] %vm260, %v263
        %s266 = scalar_lea.vmem [#allocation4], 2
        %v267 = vld [vmem:[%s266] ss:$4 sm:$0xf]
        %s268 = scalar_lea.vmem %s184, 128
        %269 = vst.msk [vmem:[%s268] sm:$0xf] %vm260, %v267
        %s270 = scalar_lea.vmem [#allocation4], 3
        %v271 = vld [vmem:[%s270] ss:$4 sm:$0xf]
        %s272 = scalar_lea.vmem %s184, 192
        %273 = vst.msk [vmem:[%s272] sm:$0xf] %vm260, %v271
        %s274 = scalar_lea.vmem [#allocation2], 1
        %v275 = vld [vmem:[%s274] ss:$4 sm:$0xf]
        %276 = vxpose.xlu0.b32.start [1/16] %v275, 128
        %277 = vxpose.xlu0.b32.cont [2/16] 0.0, 128
        %278 = vxpose.xlu0.b32.cont [3/16] 0.0, 128
        %279 = vxpose.xlu0.b32.cont [4/16] 0.0, 128
        %280 = vxpose.xlu0.b32.cont [5/16] 0.0, 128
        %281 = vxpose.xlu0.b32.cont [6/16] 0.0, 128
        %282 = vxpose.xlu0.b32.cont [7/16] 0.0, 128
        %283 = vxpose.xlu0.b32.cont [8/16] 0.0, 128
        %284 = vxpose.xlu0.b32.cont [9/16] 0.0, 128
        %285 = vxpose.xlu0.b32.cont [10/16] 0.0, 128
        %286 = vxpose.xlu0.b32.cont [11/16] 0.0, 128
        %287 = vxpose.xlu0.b32.cont [12/16] 0.0, 128
        %288 = vxpose.xlu0.b32.cont [13/16] 0.0, 128
        %289 = vxpose.xlu0.b32.cont [14/16] 0.0, 128
        %290 = vxpose.xlu0.b32.cont [15/16] 0.0, 128
        %291 = vxpose.xlu0.b32.end [16/16] 0.0, 128
        %v292 = vpop.trf.xlu0
        %v293 = vpop.trf.xlu0
        %v294 = vpop.trf.xlu0
        %v295 = vpop.trf.xlu0
        %v296 = vpop.trf.xlu0
        %v297 = vpop.trf.xlu0
        %v298 = vpop.trf.xlu0
        %v299 = vpop.trf.xlu0
        %v300 = vpop.trf.xlu0
        %v301 = vpop.trf.xlu0
        %v302 = vpop.trf.xlu0
        %v303 = vpop.trf.xlu0
        %v304 = vpop.trf.xlu0
        %v305 = vpop.trf.xlu0
        %v306 = vpop.trf.xlu0
        %v307 = vpop.trf.xlu0
        %308 = vst.msk [vmem:[#allocation5] sm:$0xff] %vm256, %v292
        %309 = vst.msk [vmem:[#allocation5 + $0x8] sm:$0xff] %vm256, %v293
        %v310 = vld [vmem:[#allocation5] ss:$4 sm:$0xf]
        %s311 = scalar_lea.vmem %s184, 16
        %312 = vst.msk [vmem:[%s311] sm:$0xf] %vm260, %v310
        %s313 = scalar_lea.vmem [#allocation5], 1
        %v314 = vld [vmem:[%s313] ss:$4 sm:$0xf]
        %s315 = scalar_lea.vmem %s184, 80
        %316 = vst.msk [vmem:[%s315] sm:$0xf] %vm260, %v314
        %s317 = scalar_lea.vmem [#allocation5], 2
        %v318 = vld [vmem:[%s317] ss:$4 sm:$0xf]
        %s319 = scalar_lea.vmem %s184, 144
        %320 = vst.msk [vmem:[%s319] sm:$0xf] %vm260, %v318
        %s321 = scalar_lea.vmem [#allocation5], 3
        %v322 = vld [vmem:[%s321] ss:$4 sm:$0xf]
        %s323 = scalar_lea.vmem %s184, 208
        %324 = vst.msk [vmem:[%s323] sm:$0xf] %vm260, %v322
        %s325 = scalar_lea.vmem [#allocation2], 2
        %v326 = vld [vmem:[%s325] ss:$4 sm:$0xf]
        %327 = vxpose.xlu0.b32.start [1/16] %v326, 128
        %328 = vxpose.xlu0.b32.cont [2/16] 0.0, 128
        %329 = vxpose.xlu0.b32.cont [3/16] 0.0, 128
        %330 = vxpose.xlu0.b32.cont [4/16] 0.0, 128
        %331 = vxpose.xlu0.b32.cont [5/16] 0.0, 128
        %332 = vxpose.xlu0.b32.cont [6/16] 0.0, 128
        %333 = vxpose.xlu0.b32.cont [7/16] 0.0, 128
        %334 = vxpose.xlu0.b32.cont [8/16] 0.0, 128
        %335 = vxpose.xlu0.b32.cont [9/16] 0.0, 128
        %336 = vxpose.xlu0.b32.cont [10/16] 0.0, 128
        %337 = vxpose.xlu0.b32.cont [11/16] 0.0, 128
        %338 = vxpose.xlu0.b32.cont [12/16] 0.0, 128
        %339 = vxpose.xlu0.b32.cont [13/16] 0.0, 128
        %340 = vxpose.xlu0.b32.cont [14/16] 0.0, 128
        %341 = vxpose.xlu0.b32.cont [15/16] 0.0, 128
        %342 = vxpose.xlu0.b32.end [16/16] 0.0, 128
        %v343 = vpop.trf.xlu0
        %v344 = vpop.trf.xlu0
        %v345 = vpop.trf.xlu0
        %v346 = vpop.trf.xlu0
        %v347 = vpop.trf.xlu0
        %v348 = vpop.trf.xlu0
        %v349 = vpop.trf.xlu0
        %v350 = vpop.trf.xlu0
        %v351 = vpop.trf.xlu0
        %v352 = vpop.trf.xlu0
        %v353 = vpop.trf.xlu0
        %v354 = vpop.trf.xlu0
        %v355 = vpop.trf.xlu0
        %v356 = vpop.trf.xlu0
        %v357 = vpop.trf.xlu0
        %v358 = vpop.trf.xlu0
        %359 = vst.msk [vmem:[#allocation6] sm:$0xff] %vm256, %v343
        %360 = vst.msk [vmem:[#allocation6 + $0x8] sm:$0xff] %vm256, %v344
        %v361 = vld [vmem:[#allocation6] ss:$4 sm:$0xf]
        %s362 = scalar_lea.vmem %s184, 32
        %363 = vst.msk [vmem:[%s362] sm:$0xf] %vm260, %v361
        %s364 = scalar_lea.vmem [#allocation6], 1
        %v365 = vld [vmem:[%s364] ss:$4 sm:$0xf]
        %s366 = scalar_lea.vmem %s184, 96
        %367 = vst.msk [vmem:[%s366] sm:$0xf] %vm260, %v365
        %s368 = scalar_lea.vmem [#allocation6], 2
        %v369 = vld [vmem:[%s368] ss:$4 sm:$0xf]
        %s370 = scalar_lea.vmem %s184, 160
        %371 = vst.msk [vmem:[%s370] sm:$0xf] %vm260, %v369
        %s372 = scalar_lea.vmem [#allocation6], 3
        %v373 = vld [vmem:[%s372] ss:$4 sm:$0xf]
        %s374 = scalar_lea.vmem %s184, 224
        %375 = vst.msk [vmem:[%s374] sm:$0xf] %vm260, %v373
        %s376 = scalar_lea.vmem [#allocation2], 3
        %v377 = vld [vmem:[%s376] ss:$4 sm:$0xf]
        %378 = vxpose.xlu0.b32.start [1/16] %v377, 128
        %379 = vxpose.xlu0.b32.cont [2/16] 0.0, 128
        %380 = vxpose.xlu0.b32.cont [3/16] 0.0, 128
        %381 = vxpose.xlu0.b32.cont [4/16] 0.0, 128
        %382 = vxpose.xlu0.b32.cont [5/16] 0.0, 128
        %383 = vxpose.xlu0.b32.cont [6/16] 0.0, 128
        %384 = vxpose.xlu0.b32.cont [7/16] 0.0, 128
        %385 = vxpose.xlu0.b32.cont [8/16] 0.0, 128
        %386 = vxpose.xlu0.b32.cont [9/16] 0.0, 128
        %387 = vxpose.xlu0.b32.cont [10/16] 0.0, 128
        %388 = vxpose.xlu0.b32.cont [11/16] 0.0, 128
        %389 = vxpose.xlu0.b32.cont [12/16] 0.0, 128
        %390 = vxpose.xlu0.b32.cont [13/16] 0.0, 128
        %391 = vxpose.xlu0.b32.cont [14/16] 0.0, 128
        %392 = vxpose.xlu0.b32.cont [15/16] 0.0, 128
        %393 = vxpose.xlu0.b32.end [16/16] 0.0, 128
        %v394 = vpop.trf.xlu0
        %v395 = vpop.trf.xlu0
        %v396 = vpop.trf.xlu0
        %v397 = vpop.trf.xlu0
        %v398 = vpop.trf.xlu0
        %v399 = vpop.trf.xlu0
        %v400 = vpop.trf.xlu0
        %v401 = vpop.trf.xlu0
        %v402 = vpop.trf.xlu0
        %v403 = vpop.trf.xlu0
        %v404 = vpop.trf.xlu0
        %v405 = vpop.trf.xlu0
        %v406 = vpop.trf.xlu0
        %v407 = vpop.trf.xlu0
        %v408 = vpop.trf.xlu0
        %v409 = vpop.trf.xlu0
        %410 = vst.msk [vmem:[#allocation7] sm:$0xff] %vm256, %v394
        %411 = vst.msk [vmem:[#allocation7 + $0x8] sm:$0xff] %vm256, %v395
        %v412 = vld [vmem:[#allocation7] ss:$4 sm:$0xf]
        %s413 = scalar_lea.vmem %s184, 48
        %414 = vst.msk [vmem:[%s413] sm:$0xf] %vm260, %v412
        %s415 = scalar_lea.vmem [#allocation7], 1
        %v416 = vld [vmem:[%s415] ss:$4 sm:$0xf]
        %s417 = scalar_lea.vmem %s184, 112
        %418 = vst.msk [vmem:[%s417] sm:$0xf] %vm260, %v416
        %s419 = scalar_lea.vmem [#allocation7], 2
        %v420 = vld [vmem:[%s419] ss:$4 sm:$0xf]
        %s421 = scalar_lea.vmem %s184, 176
        %422 = vst.msk [vmem:[%s421] sm:$0xf] %vm260, %v420
        %s423 = scalar_lea.vmem [#allocation7], 3
        %v424 = vld [vmem:[%s423] ss:$4 sm:$0xf]
        %s425 = scalar_lea.vmem %s184, 240
        %426 = vst.msk [vmem:[%s425] sm:$0xf] %vm260, %v424
        %s427 = scalar_lea.vmem %s145, 16 [#allocation8]
        %v428 = vld [vmem:[%s427] sm:$0xff]
        %v429 = vld [vmem:[%s427 + $0x8] sm:$0xff]
        %430 = vxpose.xlu0.b32.start [1/16] %v428, 128
        %431 = vxpose.xlu0.b32.cont [2/16] %v429, 128
        %432 = vxpose.xlu0.b32.cont [3/16] 0.0, 128
        %433 = vxpose.xlu0.b32.cont [4/16] 0.0, 128
        %434 = vxpose.xlu0.b32.cont [5/16] 0.0, 128
        %435 = vxpose.xlu0.b32.cont [6/16] 0.0, 128
        %436 = vxpose.xlu0.b32.cont [7/16] 0.0, 128
        %437 = vxpose.xlu0.b32.cont [8/16] 0.0, 128
        %438 = vxpose.xlu0.b32.cont [9/16] 0.0, 128
        %439 = vxpose.xlu0.b32.cont [10/16] 0.0, 128
        %440 = vxpose.xlu0.b32.cont [11/16] 0.0, 128
        %441 = vxpose.xlu0.b32.cont [12/16] 0.0, 128
        %442 = vxpose.xlu0.b32.cont [13/16] 0.0, 128
        %443 = vxpose.xlu0.b32.cont [14/16] 0.0, 128
        %444 = vxpose.xlu0.b32.cont [15/16] 0.0, 128
        %445 = vxpose.xlu0.b32.end [16/16] 0.0, 128
        %v446 = vpop.trf.xlu0
        %v447 = vpop.trf.xlu0
        %v448 = vpop.trf.xlu0
        %v449 = vpop.trf.xlu0
        %v450 = vpop.trf.xlu0
        %v451 = vpop.trf.xlu0
        %v452 = vpop.trf.xlu0
        %v453 = vpop.trf.xlu0
        %v454 = vpop.trf.xlu0
        %v455 = vpop.trf.xlu0
        %v456 = vpop.trf.xlu0
        %v457 = vpop.trf.xlu0
        %v458 = vpop.trf.xlu0
        %v459 = vpop.trf.xlu0
        %v460 = vpop.trf.xlu0
        %v461 = vpop.trf.xlu0
        %462 = vst.msk [vmem:[#allocation3] sm:$0xff] %vm220, %v446
        %463 = vst.msk [vmem:[#allocation3 + $0x8] sm:$0xff] %vm220, %v447
        %v464 = vld [vmem:[#allocation3] ss:$4 sm:$0xf]
        %465 = vxpose.xlu0.b32.start [1/16] %v464, 128
        %466 = vxpose.xlu0.b32.cont [2/16] 0.0, 128
        %467 = vxpose.xlu0.b32.cont [3/16] 0.0, 128
        %468 = vxpose.xlu0.b32.cont [4/16] 0.0, 128
        %469 = vxpose.xlu0.b32.cont [5/16] 0.0, 128
        %470 = vxpose.xlu0.b32.cont [6/16] 0.0, 128
        %471 = vxpose.xlu0.b32.cont [7/16] 0.0, 128
        %472 = vxpose.xlu0.b32.cont [8/16] 0.0, 128
        %473 = vxpose.xlu0.b32.cont [9/16] 0.0, 128
        %474 = vxpose.xlu0.b32.cont [10/16] 0.0, 128
        %475 = vxpose.xlu0.b32.cont [11/16] 0.0, 128
        %476 = vxpose.xlu0.b32.cont [12/16] 0.0, 128
        %477 = vxpose.xlu0.b32.cont [13/16] 0.0, 128
        %478 = vxpose.xlu0.b32.cont [14/16] 0.0, 128
        %479 = vxpose.xlu0.b32.cont [15/16] 0.0, 128
        %480 = vxpose.xlu0.b32.end [16/16] 0.0, 128
        %v481 = vpop.trf.xlu0
        %v482 = vpop.trf.xlu0
        %v483 = vpop.trf.xlu0
        %v484 = vpop.trf.xlu0
        %v485 = vpop.trf.xlu0
        %v486 = vpop.trf.xlu0
        %v487 = vpop.trf.xlu0
        %v488 = vpop.trf.xlu0
        %v489 = vpop.trf.xlu0
        %v490 = vpop.trf.xlu0
        %v491 = vpop.trf.xlu0
        %v492 = vpop.trf.xlu0
        %v493 = vpop.trf.xlu0
        %v494 = vpop.trf.xlu0
        %v495 = vpop.trf.xlu0
        %v496 = vpop.trf.xlu0
        %497 = vst.msk [vmem:[#allocation4] sm:$0xff] %vm256, %v481
        %498 = vst.msk [vmem:[#allocation4 + $0x8] sm:$0xff] %vm256, %v482
        %v499 = vld [vmem:[#allocation4] ss:$4 sm:$0xf]
        %s500 = scalar_lea.vmem %s184, 4
        %501 = vst.msk [vmem:[%s500] sm:$0xf] %vm260, %v499
        %v502 = vld [vmem:[%s262] ss:$4 sm:$0xf]
        %s503 = scalar_lea.vmem %s184, 68
        %504 = vst.msk [vmem:[%s503] sm:$0xf] %vm260, %v502
        %v505 = vld [vmem:[%s266] ss:$4 sm:$0xf]
        %s506 = scalar_lea.vmem %s184, 132
        %507 = vst.msk [vmem:[%s506] sm:$0xf] %vm260, %v505
        %v508 = vld [vmem:[%s270] ss:$4 sm:$0xf]
        %s509 = scalar_lea.vmem %s184, 196
        %510 = vst.msk [vmem:[%s509] sm:$0xf] %vm260, %v508
        %s511 = scalar_lea.vmem [#allocation3], 1
        %v512 = vld [vmem:[%s511] ss:$4 sm:$0xf]
        %513 = vxpose.xlu0.b32.start [1/16] %v512, 128
        %514 = vxpose.xlu0.b32.cont [2/16] 0.0, 128
        %515 = vxpose.xlu0.b32.cont [3/16] 0.0, 128
        %516 = vxpose.xlu0.b32.cont [4/16] 0.0, 128
        %517 = vxpose.xlu0.b32.cont [5/16] 0.0, 128
        %518 = vxpose.xlu0.b32.cont [6/16] 0.0, 128
        %519 = vxpose.xlu0.b32.cont [7/16] 0.0, 128
        %520 = vxpose.xlu0.b32.cont [8/16] 0.0, 128
        %521 = vxpose.xlu0.b32.cont [9/16] 0.0, 128
        %522 = vxpose.xlu0.b32.cont [10/16] 0.0, 128
        %523 = vxpose.xlu0.b32.cont [11/16] 0.0, 128
        %524 = vxpose.xlu0.b32.cont [12/16] 0.0, 128
        %525 = vxpose.xlu0.b32.cont [13/16] 0.0, 128
        %526 = vxpose.xlu0.b32.cont [14/16] 0.0, 128
        %527 = vxpose.xlu0.b32.cont [15/16] 0.0, 128
        %528 = vxpose.xlu0.b32.end [16/16] 0.0, 128
        %v529 = vpop.trf.xlu0
        %v530 = vpop.trf.xlu0
        %v531 = vpop.trf.xlu0
        %v532 = vpop.trf.xlu0
        %v533 = vpop.trf.xlu0
        %v534 = vpop.trf.xlu0
        %v535 = vpop.trf.xlu0
        %v536 = vpop.trf.xlu0
        %v537 = vpop.trf.xlu0
        %v538 = vpop.trf.xlu0
        %v539 = vpop.trf.xlu0
        %v540 = vpop.trf.xlu0
        %v541 = vpop.trf.xlu0
        %v542 = vpop.trf.xlu0
        %v543 = vpop.trf.xlu0
        %v544 = vpop.trf.xlu0
        %545 = vst.msk [vmem:[#allocation5] sm:$0xff] %vm256, %v529
        %546 = vst.msk [vmem:[#allocation5 + $0x8] sm:$0xff] %vm256, %v530
        %v547 = vld [vmem:[#allocation5] ss:$4 sm:$0xf]
        %s548 = scalar_lea.vmem %s184, 20
        %549 = vst.msk [vmem:[%s548] sm:$0xf] %vm260, %v547
        %v550 = vld [vmem:[%s313] ss:$4 sm:$0xf]
        %s551 = scalar_lea.vmem %s184, 84
        %552 = vst.msk [vmem:[%s551] sm:$0xf] %vm260, %v550
        %v553 = vld [vmem:[%s317] ss:$4 sm:$0xf]
        %s554 = scalar_lea.vmem %s184, 148
        %555 = vst.msk [vmem:[%s554] sm:$0xf] %vm260, %v553
        %v556 = vld [vmem:[%s321] ss:$4 sm:$0xf]
        %s557 = scalar_lea.vmem %s184, 212
        %558 = vst.msk [vmem:[%s557] sm:$0xf] %vm260, %v556
        %s559 = scalar_lea.vmem [#allocation3], 2
        %v560 = vld [vmem:[%s559] ss:$4 sm:$0xf]
        %561 = vxpose.xlu0.b32.start [1/16] %v560, 128
        %562 = vxpose.xlu0.b32.cont [2/16] 0.0, 128
        %563 = vxpose.xlu0.b32.cont [3/16] 0.0, 128
        %564 = vxpose.xlu0.b32.cont [4/16] 0.0, 128
        %565 = vxpose.xlu0.b32.cont [5/16] 0.0, 128
        %566 = vxpose.xlu0.b32.cont [6/16] 0.0, 128
        %567 = vxpose.xlu0.b32.cont [7/16] 0.0, 128
        %568 = vxpose.xlu0.b32.cont [8/16] 0.0, 128
        %569 = vxpose.xlu0.b32.cont [9/16] 0.0, 128
        %570 = vxpose.xlu0.b32.cont [10/16] 0.0, 128
        %571 = vxpose.xlu0.b32.cont [11/16] 0.0, 128
        %572 = vxpose.xlu0.b32.cont [12/16] 0.0, 128
        %573 = vxpose.xlu0.b32.cont [13/16] 0.0, 128
        %574 = vxpose.xlu0.b32.cont [14/16] 0.0, 128
        %575 = vxpose.xlu0.b32.cont [15/16] 0.0, 128
        %576 = vxpose.xlu0.b32.end [16/16] 0.0, 128
        %v577 = vpop.trf.xlu0
        %v578 = vpop.trf.xlu0
        %v579 = vpop.trf.xlu0
        %v580 = vpop.trf.xlu0
        %v581 = vpop.trf.xlu0
        %v582 = vpop.trf.xlu0
        %v583 = vpop.trf.xlu0
        %v584 = vpop.trf.xlu0
        %v585 = vpop.trf.xlu0
        %v586 = vpop.trf.xlu0
        %v587 = vpop.trf.xlu0
        %v588 = vpop.trf.xlu0
        %v589 = vpop.trf.xlu0
        %v590 = vpop.trf.xlu0
        %v591 = vpop.trf.xlu0
        %v592 = vpop.trf.xlu0
        %593 = vst.msk [vmem:[#allocation6] sm:$0xff] %vm256, %v577
        %594 = vst.msk [vmem:[#allocation6 + $0x8] sm:$0xff] %vm256, %v578
        %v595 = vld [vmem:[#allocation6] ss:$4 sm:$0xf]
        %s596 = scalar_lea.vmem %s184, 36
        %597 = vst.msk [vmem:[%s596] sm:$0xf] %vm260, %v595
        %v598 = vld [vmem:[%s364] ss:$4 sm:$0xf]
        %s599 = scalar_lea.vmem %s184, 100
        %600 = vst.msk [vmem:[%s599] sm:$0xf] %vm260, %v598
        %v601 = vld [vmem:[%s368] ss:$4 sm:$0xf]
        %s602 = scalar_lea.vmem %s184, 164
        %603 = vst.msk [vmem:[%s602] sm:$0xf] %vm260, %v601
        %v604 = vld [vmem:[%s372] ss:$4 sm:$0xf]
        %s605 = scalar_lea.vmem %s184, 228
        %606 = vst.msk [vmem:[%s605] sm:$0xf] %vm260, %v604
        %s607 = scalar_lea.vmem [#allocation3], 3
        %v608 = vld [vmem:[%s607] ss:$4 sm:$0xf]
        %609 = vxpose.xlu0.b32.start [1/16] %v608, 128
        %610 = vxpose.xlu0.b32.cont [2/16] 0.0, 128
        %611 = vxpose.xlu0.b32.cont [3/16] 0.0, 128
        %612 = vxpose.xlu0.b32.cont [4/16] 0.0, 128
        %613 = vxpose.xlu0.b32.cont [5/16] 0.0, 128
        %614 = vxpose.xlu0.b32.cont [6/16] 0.0, 128
        %615 = vxpose.xlu0.b32.cont [7/16] 0.0, 128
        %616 = vxpose.xlu0.b32.cont [8/16] 0.0, 128
        %617 = vxpose.xlu0.b32.cont [9/16] 0.0, 128
        %618 = vxpose.xlu0.b32.cont [10/16] 0.0, 128
        %619 = vxpose.xlu0.b32.cont [11/16] 0.0, 128
        %620 = vxpose.xlu0.b32.cont [12/16] 0.0, 128
        %621 = vxpose.xlu0.b32.cont [13/16] 0.0, 128
        %622 = vxpose.xlu0.b32.cont [14/16] 0.0, 128
        %623 = vxpose.xlu0.b32.cont [15/16] 0.0, 128
        %624 = vxpose.xlu0.b32.end [16/16] 0.0, 128
        %v625 = vpop.trf.xlu0
        %v626 = vpop.trf.xlu0
        %v627 = vpop.trf.xlu0
        %v628 = vpop.trf.xlu0
        %v629 = vpop.trf.xlu0
        %v630 = vpop.trf.xlu0
        %v631 = vpop.trf.xlu0
        %v632 = vpop.trf.xlu0
        %v633 = vpop.trf.xlu0
        %v634 = vpop.trf.xlu0
        %v635 = vpop.trf.xlu0
        %v636 = vpop.trf.xlu0
        %v637 = vpop.trf.xlu0
        %v638 = vpop.trf.xlu0
        %v639 = vpop.trf.xlu0
        %v640 = vpop.trf.xlu0
        %641 = vst.msk [vmem:[#allocation7] sm:$0xff] %vm256, %v625
        %642 = vst.msk [vmem:[#allocation7 + $0x8] sm:$0xff] %vm256, %v626
        %v643 = vld [vmem:[#allocation7] ss:$4 sm:$0xf]
        %s644 = scalar_lea.vmem %s184, 52
        %645 = vst.msk [vmem:[%s644] sm:$0xf] %vm260, %v643
        %v646 = vld [vmem:[%s415] ss:$4 sm:$0xf]
        %s647 = scalar_lea.vmem %s184, 116
        %648 = vst.msk [vmem:[%s647] sm:$0xf] %vm260, %v646
        %v649 = vld [vmem:[%s419] ss:$4 sm:$0xf]
        %s650 = scalar_lea.vmem %s184, 180
        %651 = vst.msk [vmem:[%s650] sm:$0xf] %vm260, %v649
        %v652 = vld [vmem:[%s423] ss:$4 sm:$0xf]
        %s653 = scalar_lea.vmem %s184, 244
        %654 = vst.msk [vmem:[%s653] sm:$0xf] %vm260, %v652
        %s655 = scalar_lea.vmem %s145, 32 [#allocation8]
        %v656 = vld [vmem:[%s655] sm:$0xff]
        %v657 = vld [vmem:[%s655 + $0x8] sm:$0xff]
        %658 = vxpose.xlu0.b32.start [1/16] %v656, 128
        %659 = vxpose.xlu0.b32.cont [2/16] %v657, 128
        %660 = vxpose.xlu0.b32.cont [3/16] 0.0, 128
        %661 = vxpose.xlu0.b32.cont [4/16] 0.0, 128
        %662 = vxpose.xlu0.b32.cont [5/16] 0.0, 128
        %663 = vxpose.xlu0.b32.cont [6/16] 0.0, 128
        %664 = vxpose.xlu0.b32.cont [7/16] 0.0, 128
        %665 = vxpose.xlu0.b32.cont [8/16] 0.0, 128
        %666 = vxpose.xlu0.b32.cont [9/16] 0.0, 128
        %667 = vxpose.xlu0.b32.cont [10/16] 0.0, 128
        %668 = vxpose.xlu0.b32.cont [11/16] 0.0, 128
        %669 = vxpose.xlu0.b32.cont [12/16] 0.0, 128
        %670 = vxpose.xlu0.b32.cont [13/16] 0.0, 128
        %671 = vxpose.xlu0.b32.cont [14/16] 0.0, 128
        %672 = vxpose.xlu0.b32.cont [15/16] 0.0, 128
        %673 = vxpose.xlu0.b32.end [16/16] 0.0, 128
        %v674 = vpop.trf.xlu0
        %v675 = vpop.trf.xlu0
        %v676 = vpop.trf.xlu0
        %v677 = vpop.trf.xlu0
        %v678 = vpop.trf.xlu0
        %v679 = vpop.trf.xlu0
        %v680 = vpop.trf.xlu0
        %v681 = vpop.trf.xlu0
        %v682 = vpop.trf.xlu0
        %v683 = vpop.trf.xlu0
        %v684 = vpop.trf.xlu0
        %v685 = vpop.trf.xlu0
        %v686 = vpop.trf.xlu0
        %v687 = vpop.trf.xlu0
        %v688 = vpop.trf.xlu0
        %v689 = vpop.trf.xlu0
        %690 = vst.msk [vmem:[#allocation2] sm:$0xff] %vm220, %v674
        %691 = vst.msk [vmem:[#allocation2 + $0x8] sm:$0xff] %vm220, %v675
        %v692 = vld [vmem:[#allocation2] ss:$4 sm:$0xf]
        %693 = vxpose.xlu0.b32.start [1/16] %v692, 128
        %694 = vxpose.xlu0.b32.cont [2/16] 0.0, 128
        %695 = vxpose.xlu0.b32.cont [3/16] 0.0, 128
        %696 = vxpose.xlu0.b32.cont [4/16] 0.0, 128
        %697 = vxpose.xlu0.b32.cont [5/16] 0.0, 128
        %698 = vxpose.xlu0.b32.cont [6/16] 0.0, 128
        %699 = vxpose.xlu0.b32.cont [7/16] 0.0, 128
        %700 = vxpose.xlu0.b32.cont [8/16] 0.0, 128
        %701 = vxpose.xlu0.b32.cont [9/16] 0.0, 128
        %702 = vxpose.xlu0.b32.cont [10/16] 0.0, 128
        %703 = vxpose.xlu0.b32.cont [11/16] 0.0, 128
        %704 = vxpose.xlu0.b32.cont [12/16] 0.0, 128
        %705 = vxpose.xlu0.b32.cont [13/16] 0.0, 128
        %706 = vxpose.xlu0.b32.cont [14/16] 0.0, 128
        %707 = vxpose.xlu0.b32.cont [15/16] 0.0, 128
        %708 = vxpose.xlu0.b32.end [16/16] 0.0, 128
        %v709 = vpop.trf.xlu0
        %v710 = vpop.trf.xlu0
        %v711 = vpop.trf.xlu0
        %v712 = vpop.trf.xlu0
        %v713 = vpop.trf.xlu0
        %v714 = vpop.trf.xlu0
        %v715 = vpop.trf.xlu0
        %v716 = vpop.trf.xlu0
        %v717 = vpop.trf.xlu0
        %v718 = vpop.trf.xlu0
        %v719 = vpop.trf.xlu0
        %v720 = vpop.trf.xlu0
        %v721 = vpop.trf.xlu0
        %v722 = vpop.trf.xlu0
        %v723 = vpop.trf.xlu0
        %v724 = vpop.trf.xlu0
        %725 = vst.msk [vmem:[#allocation4] sm:$0xff] %vm256, %v709
        %726 = vst.msk [vmem:[#allocation4 + $0x8] sm:$0xff] %vm256, %v710
        %v727 = vld [vmem:[#allocation4] ss:$4 sm:$0xf]
        %s728 = scalar_lea.vmem %s184, 8
        %729 = vst.msk [vmem:[%s728] sm:$0xf] %vm260, %v727
        %v730 = vld [vmem:[%s262] ss:$4 sm:$0xf]
        %s731 = scalar_lea.vmem %s184, 72
        %732 = vst.msk [vmem:[%s731] sm:$0xf] %vm260, %v730
        %v733 = vld [vmem:[%s266] ss:$4 sm:$0xf]
        %s734 = scalar_lea.vmem %s184, 136
        %735 = vst.msk [vmem:[%s734] sm:$0xf] %vm260, %v733
        %v736 = vld [vmem:[%s270] ss:$4 sm:$0xf]
        %s737 = scalar_lea.vmem %s184, 200
        %738 = vst.msk [vmem:[%s737] sm:$0xf] %vm260, %v736
        %v739 = vld [vmem:[%s274] ss:$4 sm:$0xf]
        %740 = vxpose.xlu0.b32.start [1/16] %v739, 128
        %741 = vxpose.xlu0.b32.cont [2/16] 0.0, 128
        %742 = vxpose.xlu0.b32.cont [3/16] 0.0, 128
        %743 = vxpose.xlu0.b32.cont [4/16] 0.0, 128
        %744 = vxpose.xlu0.b32.cont [5/16] 0.0, 128
        %745 = vxpose.xlu0.b32.cont [6/16] 0.0, 128
        %746 = vxpose.xlu0.b32.cont [7/16] 0.0, 128
        %747 = vxpose.xlu0.b32.cont [8/16] 0.0, 128
        %748 = vxpose.xlu0.b32.cont [9/16] 0.0, 128
        %749 = vxpose.xlu0.b32.cont [10/16] 0.0, 128
        %750 = vxpose.xlu0.b32.cont [11/16] 0.0, 128
        %751 = vxpose.xlu0.b32.cont [12/16] 0.0, 128
        %752 = vxpose.xlu0.b32.cont [13/16] 0.0, 128
        %753 = vxpose.xlu0.b32.cont [14/16] 0.0, 128
        %754 = vxpose.xlu0.b32.cont [15/16] 0.0, 128
        %755 = vxpose.xlu0.b32.end [16/16] 0.0, 128
        %v756 = vpop.trf.xlu0
        %v757 = vpop.trf.xlu0
        %v758 = vpop.trf.xlu0
        %v759 = vpop.trf.xlu0
        %v760 = vpop.trf.xlu0
        %v761 = vpop.trf.xlu0
        %v762 = vpop.trf.xlu0
        %v763 = vpop.trf.xlu0
        %v764 = vpop.trf.xlu0
        %v765 = vpop.trf.xlu0
        %v766 = vpop.trf.xlu0
        %v767 = vpop.trf.xlu0
        %v768 = vpop.trf.xlu0
        %v769 = vpop.trf.xlu0
        %v770 = vpop.trf.xlu0
        %v771 = vpop.trf.xlu0
        %772 = vst.msk [vmem:[#allocation5] sm:$0xff] %vm256, %v756
        %773 = vst.msk [vmem:[#allocation5 + $0x8] sm:$0xff] %vm256, %v757
        %v774 = vld [vmem:[#allocation5] ss:$4 sm:$0xf]
        %s775 = scalar_lea.vmem %s184, 24
        %776 = vst.msk [vmem:[%s775] sm:$0xf] %vm260, %v774
        %v777 = vld [vmem:[%s313] ss:$4 sm:$0xf]
        %s778 = scalar_lea.vmem %s184, 88
        %779 = vst.msk [vmem:[%s778] sm:$0xf] %vm260, %v777
        %v780 = vld [vmem:[%s317] ss:$4 sm:$0xf]
        %s781 = scalar_lea.vmem %s184, 152
        %782 = vst.msk [vmem:[%s781] sm:$0xf] %vm260, %v780
        %v783 = vld [vmem:[%s321] ss:$4 sm:$0xf]
        %s784 = scalar_lea.vmem %s184, 216
        %785 = vst.msk [vmem:[%s784] sm:$0xf] %vm260, %v783
        %v786 = vld [vmem:[%s325] ss:$4 sm:$0xf]
        %787 = vxpose.xlu0.b32.start [1/16] %v786, 128
        %788 = vxpose.xlu0.b32.cont [2/16] 0.0, 128
        %789 = vxpose.xlu0.b32.cont [3/16] 0.0, 128
        %790 = vxpose.xlu0.b32.cont [4/16] 0.0, 128
        %791 = vxpose.xlu0.b32.cont [5/16] 0.0, 128
        %792 = vxpose.xlu0.b32.cont [6/16] 0.0, 128
        %793 = vxpose.xlu0.b32.cont [7/16] 0.0, 128
        %794 = vxpose.xlu0.b32.cont [8/16] 0.0, 128
        %795 = vxpose.xlu0.b32.cont [9/16] 0.0, 128
        %796 = vxpose.xlu0.b32.cont [10/16] 0.0, 128
        %797 = vxpose.xlu0.b32.cont [11/16] 0.0, 128
        %798 = vxpose.xlu0.b32.cont [12/16] 0.0, 128
        %799 = vxpose.xlu0.b32.cont [13/16] 0.0, 128
        %800 = vxpose.xlu0.b32.cont [14/16] 0.0, 128
        %801 = vxpose.xlu0.b32.cont [15/16] 0.0, 128
        %802 = vxpose.xlu0.b32.end [16/16] 0.0, 128
        %v803 = vpop.trf.xlu0
        %v804 = vpop.trf.xlu0
        %v805 = vpop.trf.xlu0
        %v806 = vpop.trf.xlu0
        %v807 = vpop.trf.xlu0
        %v808 = vpop.trf.xlu0
        %v809 = vpop.trf.xlu0
        %v810 = vpop.trf.xlu0
        %v811 = vpop.trf.xlu0
        %v812 = vpop.trf.xlu0
        %v813 = vpop.trf.xlu0
        %v814 = vpop.trf.xlu0
        %v815 = vpop.trf.xlu0
        %v816 = vpop.trf.xlu0
        %v817 = vpop.trf.xlu0
        %v818 = vpop.trf.xlu0
        %819 = vst.msk [vmem:[#allocation6] sm:$0xff] %vm256, %v803
        %820 = vst.msk [vmem:[#allocation6 + $0x8] sm:$0xff] %vm256, %v804
        %v821 = vld [vmem:[#allocation6] ss:$4 sm:$0xf]
        %s822 = scalar_lea.vmem %s184, 40
        %823 = vst.msk [vmem:[%s822] sm:$0xf] %vm260, %v821
        %v824 = vld [vmem:[%s364] ss:$4 sm:$0xf]
        %s825 = scalar_lea.vmem %s184, 104
        %826 = vst.msk [vmem:[%s825] sm:$0xf] %vm260, %v824
        %v827 = vld [vmem:[%s368] ss:$4 sm:$0xf]
        %s828 = scalar_lea.vmem %s184, 168
        %829 = vst.msk [vmem:[%s828] sm:$0xf] %vm260, %v827
        %v830 = vld [vmem:[%s372] ss:$4 sm:$0xf]
        %s831 = scalar_lea.vmem %s184, 232
        %832 = vst.msk [vmem:[%s831] sm:$0xf] %vm260, %v830
        %v833 = vld [vmem:[%s376] ss:$4 sm:$0xf]
        %834 = vxpose.xlu0.b32.start [1/16] %v833, 128
        %835 = vxpose.xlu0.b32.cont [2/16] 0.0, 128
        %836 = vxpose.xlu0.b32.cont [3/16] 0.0, 128
        %837 = vxpose.xlu0.b32.cont [4/16] 0.0, 128
        %838 = vxpose.xlu0.b32.cont [5/16] 0.0, 128
        %839 = vxpose.xlu0.b32.cont [6/16] 0.0, 128
        %840 = vxpose.xlu0.b32.cont [7/16] 0.0, 128
        %841 = vxpose.xlu0.b32.cont [8/16] 0.0, 128
        %842 = vxpose.xlu0.b32.cont [9/16] 0.0, 128
        %843 = vxpose.xlu0.b32.cont [10/16] 0.0, 128
        %844 = vxpose.xlu0.b32.cont [11/16] 0.0, 128
        %845 = vxpose.xlu0.b32.cont [12/16] 0.0, 128
        %846 = vxpose.xlu0.b32.cont [13/16] 0.0, 128
        %847 = vxpose.xlu0.b32.cont [14/16] 0.0, 128
        %848 = vxpose.xlu0.b32.cont [15/16] 0.0, 128
        %849 = vxpose.xlu0.b32.end [16/16] 0.0, 128
        %v850 = vpop.trf.xlu0
        %v851 = vpop.trf.xlu0
        %v852 = vpop.trf.xlu0
        %v853 = vpop.trf.xlu0
        %v854 = vpop.trf.xlu0
        %v855 = vpop.trf.xlu0
        %v856 = vpop.trf.xlu0
        %v857 = vpop.trf.xlu0
        %v858 = vpop.trf.xlu0
        %v859 = vpop.trf.xlu0
        %v860 = vpop.trf.xlu0
        %v861 = vpop.trf.xlu0
        %v862 = vpop.trf.xlu0
        %v863 = vpop.trf.xlu0
        %v864 = vpop.trf.xlu0
        %v865 = vpop.trf.xlu0
        %866 = vst.msk [vmem:[#allocation7] sm:$0xff] %vm256, %v850
        %867 = vst.msk [vmem:[#allocation7 + $0x8] sm:$0xff] %vm256, %v851
        %v868 = vld [vmem:[#allocation7] ss:$4 sm:$0xf]
        %s869 = scalar_lea.vmem %s184, 56
        %870 = vst.msk [vmem:[%s869] sm:$0xf] %vm260, %v868
        %v871 = vld [vmem:[%s415] ss:$4 sm:$0xf]
        %s872 = scalar_lea.vmem %s184, 120
        %873 = vst.msk [vmem:[%s872] sm:$0xf] %vm260, %v871
        %v874 = vld [vmem:[%s419] ss:$4 sm:$0xf]
        %s875 = scalar_lea.vmem %s184, 184
        %876 = vst.msk [vmem:[%s875] sm:$0xf] %vm260, %v874
        %v877 = vld [vmem:[%s423] ss:$4 sm:$0xf]
        %s878 = scalar_lea.vmem %s184, 248
        %879 = vst.msk [vmem:[%s878] sm:$0xf] %vm260, %v877
        %s880 = scalar_lea.vmem %s145, 48 [#allocation8]
        %v881 = vld [vmem:[%s880] sm:$0xff]
        %v882 = vld [vmem:[%s880 + $0x8] sm:$0xff]
        %883 = vxpose.xlu0.b32.start [1/16] %v881, 128
        %884 = vxpose.xlu0.b32.cont [2/16] %v882, 128
        %885 = vxpose.xlu0.b32.cont [3/16] 0.0, 128
        %886 = vxpose.xlu0.b32.cont [4/16] 0.0, 128
        %887 = vxpose.xlu0.b32.cont [5/16] 0.0, 128
        %888 = vxpose.xlu0.b32.cont [6/16] 0.0, 128
        %889 = vxpose.xlu0.b32.cont [7/16] 0.0, 128
        %890 = vxpose.xlu0.b32.cont [8/16] 0.0, 128
        %891 = vxpose.xlu0.b32.cont [9/16] 0.0, 128
        %892 = vxpose.xlu0.b32.cont [10/16] 0.0, 128
        %893 = vxpose.xlu0.b32.cont [11/16] 0.0, 128
        %894 = vxpose.xlu0.b32.cont [12/16] 0.0, 128
        %895 = vxpose.xlu0.b32.cont [13/16] 0.0, 128
        %896 = vxpose.xlu0.b32.cont [14/16] 0.0, 128
        %897 = vxpose.xlu0.b32.cont [15/16] 0.0, 128
        %898 = vxpose.xlu0.b32.end [16/16] 0.0, 128
        %v899 = vpop.trf.xlu0
        %v900 = vpop.trf.xlu0
        %v901 = vpop.trf.xlu0
        %v902 = vpop.trf.xlu0
        %v903 = vpop.trf.xlu0
        %v904 = vpop.trf.xlu0
        %v905 = vpop.trf.xlu0
        %v906 = vpop.trf.xlu0
        %v907 = vpop.trf.xlu0
        %v908 = vpop.trf.xlu0
        %v909 = vpop.trf.xlu0
        %v910 = vpop.trf.xlu0
        %v911 = vpop.trf.xlu0
        %v912 = vpop.trf.xlu0
        %v913 = vpop.trf.xlu0
        %v914 = vpop.trf.xlu0
        %915 = vst.msk [vmem:[#allocation3] sm:$0xff] %vm220, %v899
        %916 = vst.msk [vmem:[#allocation3 + $0x8] sm:$0xff] %vm220, %v900
        %v917 = vld [vmem:[#allocation3] ss:$4 sm:$0xf]
        %918 = vxpose.xlu0.b32.start [1/16] %v917, 128
        %919 = vxpose.xlu0.b32.cont [2/16] 0.0, 128
        %920 = vxpose.xlu0.b32.cont [3/16] 0.0, 128
        %921 = vxpose.xlu0.b32.cont [4/16] 0.0, 128
        %922 = vxpose.xlu0.b32.cont [5/16] 0.0, 128
        %923 = vxpose.xlu0.b32.cont [6/16] 0.0, 128
        %924 = vxpose.xlu0.b32.cont [7/16] 0.0, 128
        %925 = vxpose.xlu0.b32.cont [8/16] 0.0, 128
        %926 = vxpose.xlu0.b32.cont [9/16] 0.0, 128
        %927 = vxpose.xlu0.b32.cont [10/16] 0.0, 128
        %928 = vxpose.xlu0.b32.cont [11/16] 0.0, 128
        %929 = vxpose.xlu0.b32.cont [12/16] 0.0, 128
        %930 = vxpose.xlu0.b32.cont [13/16] 0.0, 128
        %931 = vxpose.xlu0.b32.cont [14/16] 0.0, 128
        %932 = vxpose.xlu0.b32.cont [15/16] 0.0, 128
        %933 = vxpose.xlu0.b32.end [16/16] 0.0, 128
        %v934 = vpop.trf.xlu0
        %v935 = vpop.trf.xlu0
        %v936 = vpop.trf.xlu0
        %v937 = vpop.trf.xlu0
        %v938 = vpop.trf.xlu0
        %v939 = vpop.trf.xlu0
        %v940 = vpop.trf.xlu0
        %v941 = vpop.trf.xlu0
        %v942 = vpop.trf.xlu0
        %v943 = vpop.trf.xlu0
        %v944 = vpop.trf.xlu0
        %v945 = vpop.trf.xlu0
        %v946 = vpop.trf.xlu0
        %v947 = vpop.trf.xlu0
        %v948 = vpop.trf.xlu0
        %v949 = vpop.trf.xlu0
        %950 = vst.msk [vmem:[#allocation4] sm:$0xff] %vm256, %v934
        %951 = vst.msk [vmem:[#allocation4 + $0x8] sm:$0xff] %vm256, %v935
        %v952 = vld [vmem:[#allocation4] ss:$4 sm:$0xf]
        %s953 = scalar_lea.vmem %s184, 12
        %954 = vst.msk [vmem:[%s953] sm:$0xf] %vm260, %v952
        %v955 = vld [vmem:[%s262] ss:$4 sm:$0xf]
        %s956 = scalar_lea.vmem %s184, 76
        %957 = vst.msk [vmem:[%s956] sm:$0xf] %vm260, %v955
        %v958 = vld [vmem:[%s266] ss:$4 sm:$0xf]
        %s959 = scalar_lea.vmem %s184, 140
        %960 = vst.msk [vmem:[%s959] sm:$0xf] %vm260, %v958
        %v961 = vld [vmem:[%s270] ss:$4 sm:$0xf]
        %s962 = scalar_lea.vmem %s184, 204
        %963 = vst.msk [vmem:[%s962] sm:$0xf] %vm260, %v961
        %v964 = vld [vmem:[%s511] ss:$4 sm:$0xf]
        %965 = vxpose.xlu0.b32.start [1/16] %v964, 128
        %966 = vxpose.xlu0.b32.cont [2/16] 0.0, 128
        %967 = vxpose.xlu0.b32.cont [3/16] 0.0, 128
        %968 = vxpose.xlu0.b32.cont [4/16] 0.0, 128
        %969 = vxpose.xlu0.b32.cont [5/16] 0.0, 128
        %970 = vxpose.xlu0.b32.cont [6/16] 0.0, 128
        %971 = vxpose.xlu0.b32.cont [7/16] 0.0, 128
        %972 = vxpose.xlu0.b32.cont [8/16] 0.0, 128
        %973 = vxpose.xlu0.b32.cont [9/16] 0.0, 128
        %974 = vxpose.xlu0.b32.cont [10/16] 0.0, 128
        %975 = vxpose.xlu0.b32.cont [11/16] 0.0, 128
        %976 = vxpose.xlu0.b32.cont [12/16] 0.0, 128
        %977 = vxpose.xlu0.b32.cont [13/16] 0.0, 128
        %978 = vxpose.xlu0.b32.cont [14/16] 0.0, 128
        %979 = vxpose.xlu0.b32.cont [15/16] 0.0, 128
        %980 = vxpose.xlu0.b32.end [16/16] 0.0, 128
        %v981 = vpop.trf.xlu0
        %v982 = vpop.trf.xlu0
        %v983 = vpop.trf.xlu0
        %v984 = vpop.trf.xlu0
        %v985 = vpop.trf.xlu0
        %v986 = vpop.trf.xlu0
        %v987 = vpop.trf.xlu0
        %v988 = vpop.trf.xlu0
        %v989 = vpop.trf.xlu0
        %v990 = vpop.trf.xlu0
        %v991 = vpop.trf.xlu0
        %v992 = vpop.trf.xlu0
        %v993 = vpop.trf.xlu0
        %v994 = vpop.trf.xlu0
        %v995 = vpop.trf.xlu0
        %v996 = vpop.trf.xlu0
        %997 = vst.msk [vmem:[#allocation5] sm:$0xff] %vm256, %v981
        %998 = vst.msk [vmem:[#allocation5 + $0x8] sm:$0xff] %vm256, %v982
        %v999 = vld [vmem:[#allocation5] ss:$4 sm:$0xf]
        %s1000 = scalar_lea.vmem %s184, 28
        %1001 = vst.msk [vmem:[%s1000] sm:$0xf] %vm260, %v999
        %v1002 = vld [vmem:[%s313] ss:$4 sm:$0xf]
        %s1003 = scalar_lea.vmem %s184, 92
        %1004 = vst.msk [vmem:[%s1003] sm:$0xf] %vm260, %v1002
        %v1005 = vld [vmem:[%s317] ss:$4 sm:$0xf]
        %s1006 = scalar_lea.vmem %s184, 156
        %1007 = vst.msk [vmem:[%s1006] sm:$0xf] %vm260, %v1005
        %v1008 = vld [vmem:[%s321] ss:$4 sm:$0xf]
        %s1009 = scalar_lea.vmem %s184, 220
        %1010 = vst.msk [vmem:[%s1009] sm:$0xf] %vm260, %v1008
        %v1011 = vld [vmem:[%s559] ss:$4 sm:$0xf]
        %1012 = vxpose.xlu0.b32.start [1/16] %v1011, 128
        %1013 = vxpose.xlu0.b32.cont [2/16] 0.0, 128
        %1014 = vxpose.xlu0.b32.cont [3/16] 0.0, 128
        %1015 = vxpose.xlu0.b32.cont [4/16] 0.0, 128
        %1016 = vxpose.xlu0.b32.cont [5/16] 0.0, 128
        %1017 = vxpose.xlu0.b32.cont [6/16] 0.0, 128
        %1018 = vxpose.xlu0.b32.cont [7/16] 0.0, 128
        %1019 = vxpose.xlu0.b32.cont [8/16] 0.0, 128
        %1020 = vxpose.xlu0.b32.cont [9/16] 0.0, 128
        %1021 = vxpose.xlu0.b32.cont [10/16] 0.0, 128
        %1022 = vxpose.xlu0.b32.cont [11/16] 0.0, 128
        %1023 = vxpose.xlu0.b32.cont [12/16] 0.0, 128
        %1024 = vxpose.xlu0.b32.cont [13/16] 0.0, 128
        %1025 = vxpose.xlu0.b32.cont [14/16] 0.0, 128
        %1026 = vxpose.xlu0.b32.cont [15/16] 0.0, 128
        %1027 = vxpose.xlu0.b32.end [16/16] 0.0, 128
        %v1028 = vpop.trf.xlu0
        %v1029 = vpop.trf.xlu0
        %v1030 = vpop.trf.xlu0
        %v1031 = vpop.trf.xlu0
        %v1032 = vpop.trf.xlu0
        %v1033 = vpop.trf.xlu0
        %v1034 = vpop.trf.xlu0
        %v1035 = vpop.trf.xlu0
        %v1036 = vpop.trf.xlu0
        %v1037 = vpop.trf.xlu0
        %v1038 = vpop.trf.xlu0
        %v1039 = vpop.trf.xlu0
        %v1040 = vpop.trf.xlu0
        %v1041 = vpop.trf.xlu0
        %v1042 = vpop.trf.xlu0
        %v1043 = vpop.trf.xlu0
        %1044 = vst.msk [vmem:[#allocation6] sm:$0xff] %vm256, %v1028
        %1045 = vst.msk [vmem:[#allocation6 + $0x8] sm:$0xff] %vm256, %v1029
        %v1046 = vld [vmem:[#allocation6] ss:$4 sm:$0xf]
        %s1047 = scalar_lea.vmem %s184, 44
        %1048 = vst.msk [vmem:[%s1047] sm:$0xf] %vm260, %v1046
        %v1049 = vld [vmem:[%s364] ss:$4 sm:$0xf]
        %s1050 = scalar_lea.vmem %s184, 108
        %1051 = vst.msk [vmem:[%s1050] sm:$0xf] %vm260, %v1049
        %v1052 = vld [vmem:[%s368] ss:$4 sm:$0xf]
        %s1053 = scalar_lea.vmem %s184, 172
        %1054 = vst.msk [vmem:[%s1053] sm:$0xf] %vm260, %v1052
        %v1055 = vld [vmem:[%s372] ss:$4 sm:$0xf]
        %s1056 = scalar_lea.vmem %s184, 236
        %1057 = vst.msk [vmem:[%s1056] sm:$0xf] %vm260, %v1055
        %v1058 = vld [vmem:[%s607] ss:$4 sm:$0xf]
        %1059 = vxpose.xlu0.b32.start [1/16] %v1058, 128
        %1060 = vxpose.xlu0.b32.cont [2/16] 0.0, 128
        %1061 = vxpose.xlu0.b32.cont [3/16] 0.0, 128
        %1062 = vxpose.xlu0.b32.cont [4/16] 0.0, 128
        %1063 = vxpose.xlu0.b32.cont [5/16] 0.0, 128
        %1064 = vxpose.xlu0.b32.cont [6/16] 0.0, 128
        %1065 = vxpose.xlu0.b32.cont [7/16] 0.0, 128
        %1066 = vxpose.xlu0.b32.cont [8/16] 0.0, 128
        %1067 = vxpose.xlu0.b32.cont [9/16] 0.0, 128
        %1068 = vxpose.xlu0.b32.cont [10/16] 0.0, 128
        %1069 = vxpose.xlu0.b32.cont [11/16] 0.0, 128
        %1070 = vxpose.xlu0.b32.cont [12/16] 0.0, 128
        %1071 = vxpose.xlu0.b32.cont [13/16] 0.0, 128
        %1072 = vxpose.xlu0.b32.cont [14/16] 0.0, 128
        %1073 = vxpose.xlu0.b32.cont [15/16] 0.0, 128
        %1074 = vxpose.xlu0.b32.end [16/16] 0.0, 128
        %v1075 = vpop.trf.xlu0
        %v1076 = vpop.trf.xlu0
        %v1077 = vpop.trf.xlu0
        %v1078 = vpop.trf.xlu0
        %v1079 = vpop.trf.xlu0
        %v1080 = vpop.trf.xlu0
        %v1081 = vpop.trf.xlu0
        %v1082 = vpop.trf.xlu0
        %v1083 = vpop.trf.xlu0
        %v1084 = vpop.trf.xlu0
        %v1085 = vpop.trf.xlu0
        %v1086 = vpop.trf.xlu0
        %v1087 = vpop.trf.xlu0
        %v1088 = vpop.trf.xlu0
        %v1089 = vpop.trf.xlu0
        %v1090 = vpop.trf.xlu0
        %1091 = vst.msk [vmem:[#allocation7] sm:$0xff] %vm256, %v1075
        %1092 = vst.msk [vmem:[#allocation7 + $0x8] sm:$0xff] %vm256, %v1076
        %v1093 = vld [vmem:[#allocation7] ss:$4 sm:$0xf]
        %s1094 = scalar_lea.vmem %s184, 60
        %1095 = vst.msk [vmem:[%s1094] sm:$0xf] %vm260, %v1093
        %v1096 = vld [vmem:[%s415] ss:$4 sm:$0xf]
        %s1097 = scalar_lea.vmem %s184, 124
        %1098 = vst.msk [vmem:[%s1097] sm:$0xf] %vm260, %v1096
        %v1099 = vld [vmem:[%s419] ss:$4 sm:$0xf]
        %s1100 = scalar_lea.vmem %s184, 188
        %1101 = vst.msk [vmem:[%s1100] sm:$0xf] %vm260, %v1099
        %v1102 = vld [vmem:[%s423] ss:$4 sm:$0xf]
        %s1103 = scalar_lea.vmem %s184, 252
        %1104 = vst.msk [vmem:[%s1103] sm:$0xf] %vm260, %v1102
        %s1105 = smul.u32 4, %s21
        %p1106 = scmp.lt.s32.totalorder %s20, 1
        %s1107 = scalar_select %p1106, %s20, 1
        %p1108 = scmp.lt.s32.totalorder %s1105, 3
        %s1109 = scalar_select %p1108, %s1105, 3
        %p1110 = scmp.lt.s32.totalorder %s22, 0
        %s1111 = scalar_select %p1110, %s22, 0
        %s1112 = sadd.s32 %s1111, %s1109
        %s1113 = smul.addr %s1107, 64
        %s1114 = sadd.s32 %s1112, %s1113
        %s1115 = smul.addr %s1114, 4
        %s1116 = scalar_lea.vmem %s1, %s1115
        // Predicated region
        $region29: #{space_to_depth.1} parent=23 // pred_check
          %p1117 = pneg %p86
        $region30: #{space_to_depth.1} parent=23 // pred_check_branch
          %1119 = sbr.rel (%p1117) target = $region32
        $region31: #{space_to_depth.1} parent=23 // pred_region
          %s1120 = smul.u32 4, %s21
        $region32: #{space_to_depth.1} parent=23 // pred_fallthru
          _
      $region24: #{space_to_depth.1} parent=5 // pred_fallthru
        _
      %p1121 = scmp.le.s32.totalorder 2, %s10
      // Predicated region
      $region33: #{space_to_depth.1} parent=5 // pred_check
        %p1122 = pneg %p1121
      $region34: #{space_to_depth.1} parent=5 // pred_check_branch
        %1124 = sbr.rel (%p1122) target = $region36
      $region35: #{space_to_depth.1} parent=5 // pred_region
        %s1125 = ssub.s32 %s10, 2
        // Predicated region
        $region37: #{space_to_depth.1} parent=35 // pred_check
          %p1126 = pneg %p92
        $region38: #{space_to_depth.1} parent=35 // pred_check_branch
          %1128 = sbr.rel (%p1126) target = $region40
        $region39: #{space_to_depth.1} parent=35 // pred_region
          %s1129 = smul.u32 4, %s24
          %p1130 = scmp.lt.s32.totalorder %s23, 1
          %s1131 = scalar_select %p1130, %s23, 1
          %p1132 = scmp.lt.s32.totalorder %s1129, 3
          %s1133 = scalar_select %p1132, %s1129, 3
          %p1134 = scmp.lt.s32.totalorder %s25, 0
          %s1135 = scalar_select %p1134, %s25, 0
          %s1136 = sadd.s32 %s1135, %s1133
          %s1137 = smul.addr %s1131, 64
          %s1138 = sadd.s32 %s1136, %s1137
          %s1139 = smul.addr %s1138, 4
          %s1140 = scalar_lea.vmem %s1, %s1139
        $region40: #{space_to_depth.1} parent=35 // pred_fallthru
          _
      $region36: #{space_to_depth.1} parent=5 // pred_fallthru
        _
    $region6: #{space_to_depth.1} parent=1 // loop_footer
      %s14 = sadd.s32 1, %s10
    $region7: #{space_to_depth.1} parent=1 // loop_footer_branch
      %9 = sbr.rel target = $region3
    $region8: #{space_to_depth.1} parent=1 // loop_exit
      _
    %1141 = vsyncpa [#allocation9], 1
    %s1142 = scalar_lea.sflag [#allocation9], 1
    %1143 = vsyncpa %s1142, 1

</llo_original>
